<compile_context>
chip_gen: v7x
topology: tpu7x:2x2x1
jax: 0.10.0
libtpu: 0.0.40
codegen_flags: <defaults>
</compile_context>

<pallas_src>
import math

import jax
import jax.numpy as jnp
from jax import lax
from jax.experimental import pallas as pl
from jax.experimental.pallas import tpu as pltpu


_LN_EPS = 1e-5  # PyTorch nn.LayerNorm default eps


def _layernorm(v, w, b):
    # v: (M, D) f32; w, b: (1, D) f32.  Biased variance + eps=1e-5 (PyTorch LayerNorm).
    mu = jnp.mean(v, axis=-1, keepdims=True)
    var = jnp.mean((v - mu) ** 2, axis=-1, keepdims=True)
    return (v - mu) * lax.rsqrt(var + _LN_EPS) * w + b


def _gelu_exact(v):
    # nn.GELU() default = exact erf-based GELU (erf runs on the EUP slot).
    return 0.5 * v * (1.0 + lax.erf(v * (1.0 / math.sqrt(2.0))))


def mixer_block_kernel(
    x_ref,                       # (Bt, N, D)   input block
    ln1w_ref, ln1b_ref,          # (1, D) f32
    tw1t_ref, tb1_ref,           # (Td, N) bf16, (Td, 1) f32   token Linear 1 (pre-transposed)
    tw2t_ref, tb2_ref,           # (N, Td) bf16, (N, 1) f32    token Linear 2 (pre-transposed)
    ln2w_ref, ln2b_ref,          # (1, D) f32
    cw1_ref, cb1_ref,            # (D, Cd) bf16, (1, Cd) f32
    cw2_ref, cb2_ref,            # (Cd, D) bf16, (1, D) f32
    o_ref,                       # (Bt, N, D)   output block
    y_scr,                       # (Bt, N, D) f32 scratch: residual after token mixing
):
    bt, n_tok, d = x_ref.shape

    # Hoist parameter loads out of the unrolled loop (avoid re-issuing VMEM loads /
    # broadcasts per iteration).
    ln1w = ln1w_ref[...]
    ln1b = ln1b_ref[...]
    tw1t = tw1t_ref[...]
    tb1 = tb1_ref[...]
    tw2t = tw2t_ref[...]
    tb2 = tb2_ref[...]

    # ---------------- token mixing (per sample, no activation transposes) ------------
    #   hT    = W1^T @ LN(x)            : (Td, N) @ (N, D) -> (Td, D)   (D stays lane-major)
    #   tmixT = W2^T @ GELU(hT + b1^T)  : (N, Td) @ (Td, D) -> (N, D)
    def token_mix(b, carry):
        x_b = x_ref[b].astype(jnp.float32)                               # (N, D)
        xn = _layernorm(x_b, ln1w, ln1b)                                 # (N, D) f32
        hT = jnp.dot(tw1t, xn.astype(jnp.bfloat16),
                     preferred_element_type=jnp.float32)                 # (Td, D)
        hT = _gelu_exact(hT + tb1)                                       # bias per hidden-token row
        tmixT = jnp.dot(tw2t, hT.astype(jnp.bfloat16),
                        preferred_element_type=jnp.float32)              # (N, D)
        y_scr[b] = x_b + tmixT + tb2                                     # residual; bias per patch row
        return carry

    lax.fori_loop(0, bt, token_mix, 0, unroll=True)

    # ---------------- channel mixing (fused over the whole (Bt*N, D) slab) -----------
    y = y_scr[...].reshape(bt * n_tok, d)                                # (Bt*N, D) f32
    yn = _layernorm(y, ln2w_ref[...], ln2b_ref[...])
    h2 = jnp.dot(yn.astype(jnp.bfloat16), cw1_ref[...],
                 preferred_element_type=jnp.float32)                     # (Bt*N, Cd)
    h2 = _gelu_exact(h2 + cb1_ref[...])
    cmix = jnp.dot(h2.astype(jnp.bfloat16), cw2_ref[...],
                   preferred_element_type=jnp.float32)                   # (Bt*N, D)
    cmix = cmix + cb2_ref[...]

    # Single lane-dense store of the full output block.
    o_ref[...] = (y + cmix).reshape(bt, n_tok, d).astype(o_ref.dtype)


def _pick_block_batch(b, max_bt=8):
    # Largest divisor of b that is <= max_bt, preferring to keep >= 2 grid steps
    # (helps megacore balance / pipelining).
    divs = [d for d in range(1, min(b, max_bt) + 1) if b % d == 0]
    multi_step = [d for d in divs if b // d >= 2]
    return max(multi_step) if multi_step else max(divs)


def mixer_block(x, params, *, block_b=None, single_buffer_params=True):
    """MixerBlock forward. x: (B, N, D) float32. params: dict from init_params."""
    B, N, D = x.shape
    Td = params["tok_w1"].shape[1]
    Cd = params["ch_w1"].shape[1]
    bt = _pick_block_batch(B) if block_b is None else block_b
    assert B % bt == 0, "block_b must divide B"

    # Matmul weights shipped as bf16 (MXU peak rate, half the weight DMA bytes); token
    # weights pre-transposed so the kernel never transposes an activation; token biases
    # reshaped to columns so no in-kernel reshape is needed.  LN params / biases stay f32.
    param_list = [
        params["ln1_w"], params["ln1_b"],
        params["tok_w1"].T.astype(jnp.bfloat16), params["tok_b1"].reshape(-1, 1),
        params["tok_w2"].T.astype(jnp.bfloat16), params["tok_b2"].reshape(-1, 1),
        params["ln2_w"], params["ln2_b"],
        params["ch_w1"].astype(jnp.bfloat16), params["ch_b1"],
        params["ch_w2"].astype(jnp.bfloat16), params["ch_b2"],
    ]

    def param_spec(p):
        # Whole (small) parameter resident in VMEM every step; constant index_map, so
        # single-buffer it (no pointless double-buffering of static weights).
        if single_buffer_params:
            return pl.BlockSpec(p.shape, lambda i: (0, 0), pipeline_mode=pl.Buffered(1))
        return pl.BlockSpec(p.shape, lambda i: (0, 0))

    in_specs = [pl.BlockSpec((bt, N, D), lambda i: (i, 0, 0))]
    in_specs += [param_spec(p) for p in param_list]
    out_spec = pl.BlockSpec((bt, N, D), lambda i: (i, 0, 0))

    # Advisory cost estimate (erf in the two GELUs counts as transcendental work).
    flops = 4 * B * N * D * (Td + Cd)
    transcendentals = B * (Td * D + N * Cd)
    bytes_accessed = 2 * int(x.size) * x.dtype.itemsize + sum(
        int(p.size) * p.dtype.itemsize for p in param_list)

    return pl.pallas_call(
        mixer_block_kernel,
        out_shape=jax.ShapeDtypeStruct((B, N, D), x.dtype),
        grid_spec=pltpu.PrefetchScalarGridSpec(
            num_scalar_prefetch=0,
            grid=(B // bt,),
            in_specs=in_specs,
            out_specs=out_spec,
            scratch_shapes=[pltpu.VMEM((bt, N, D), jnp.float32)],
        ),
        compiler_params=pltpu.CompilerParams(
            dimension_semantics=("parallel",),
            # Above the 16/32 MiB default scoped limits, below v7x's 64 MiB physical.
            vmem_limit_bytes=48 * 1024 * 1024,
        ),
        cost_estimate=pl.CostEstimate(
            flops=flops,
            transcendentals=transcendentals,
            bytes_accessed=bytes_accessed,
        ),
    )(x, *param_list)


def init_params(key, dim, num_patch, token_dim, channel_dim):
    ks = jax.random.split(key, 4)

    def lin(k, fan_in, fan_out):
        bound = 1.0 / math.sqrt(fan_in)
        kw, kb = jax.random.split(k)
        w = jax.random.uniform(kw, (fan_in, fan_out), jnp.float32, -bound, bound)
        b = jax.random.uniform(kb, (1, fan_out), jnp.float32, -bound, bound)
        return w, b

    tok_w1, tok_b1 = lin(ks[0], num_patch, token_dim)
    tok_w2, tok_b2 = lin(ks[1], token_dim, num_patch)
    ch_w1, ch_b1 = lin(ks[2], dim, channel_dim)
    ch_w2, ch_b2 = lin(ks[3], channel_dim, dim)
    return {
        "ln1_w": jnp.ones((1, dim), jnp.float32),
        "ln1_b": jnp.zeros((1, dim), jnp.float32),
        "tok_w1": tok_w1, "tok_b1": tok_b1,
        "tok_w2": tok_w2, "tok_b2": tok_b2,
        "ln2_w": jnp.ones((1, dim), jnp.float32),
        "ln2_b": jnp.zeros((1, dim), jnp.float32),
        "ch_w1": ch_w1, "ch_b1": ch_b1,
        "ch_w2": ch_w2, "ch_b2": ch_b2,
    }


def mixer_block_ref(x, p):
    """Pure-JAX f32 reference matching the PyTorch module semantics (dropout p=0)."""
    def ln(v, w, b):
        mu = jnp.mean(v, axis=-1, keepdims=True)
        var = jnp.mean((v - mu) ** 2, axis=-1, keepdims=True)
        return (v - mu) / jnp.sqrt(var + _LN_EPS) * w + b

    xn = ln(x, p["ln1_w"][0], p["ln1_b"][0])             # (B, N, D)
    xt = jnp.swapaxes(xn, 1, 2)                          # (B, D, N)
    h = _gelu_exact(xt @ p["tok_w1"] + p["tok_b1"][0])
    tmix = h @ p["tok_w2"] + p["tok_b2"][0]              # (B, D, N)
    y = x + jnp.swapaxes(tmix, 1, 2)
    yn = ln(y, p["ln2_w"][0], p["ln2_b"][0])
    h2 = _gelu_exact(yn @ p["ch_w1"] + p["ch_b1"][0])
    cmix = h2 @ p["ch_w2"] + p["ch_b2"][0]
    return y + cmix


if __name__ == "__main__":
    # Small demo shapes.  For real MLP-Mixer sizes, pick D (and Cd/Td) as multiples
    # of 128 and N a multiple of 8 so blocks are lane/sublane dense.
    B, N, D = 4, 8, 32            # batch, num_patch, dim
    TOKEN_DIM, CHANNEL_DIM = 16, 64

    key = jax.random.PRNGKey(0)
    kx, kp = jax.random.split(key)
    x = jax.random.normal(kx, (B, N, D), jnp.float32)
    params = init_params(kp, D, N, TOKEN_DIM, CHANNEL_DIM)

    try:
        out = jax.block_until_ready(mixer_block(x, params))
    except Exception:
        # Fallback if this jax build rejects single-buffered params (pl.Buffered(1)).
        out = jax.block_until_ready(mixer_block(x, params, single_buffer_params=False))

    ref = mixer_block_ref(x, params)
    assert out.shape == (B, N, D)
    # bf16 matmul inputs (f32 accumulation) vs. an all-f32 reference -> loosened tolerance.
    max_err = float(jnp.max(jnp.abs(out - ref)))
    assert jnp.allclose(out, ref, atol=3e-2, rtol=3e-2), f"mismatch vs reference (max abs err {max_err})"

    print("KERNEL_OK")
</pallas_src>

<mosaic_0001>
module attributes {stable_mosaic.version = 11 : i64} {
  func.func @mixer_block_kernel(%arg0: i32, %arg1: memref<2x8x32xf32, #tpu.memory_space<vmem>>, %arg2: memref<1x32xf32, #tpu.memory_space<vmem>>, %arg3: memref<1x32xf32, #tpu.memory_space<vmem>>, %arg4: memref<16x8xbf16, #tpu.memory_space<vmem>>, %arg5: memref<16x1xf32, #tpu.memory_space<vmem>>, %arg6: memref<8x16xbf16, #tpu.memory_space<vmem>>, %arg7: memref<8x1xf32, #tpu.memory_space<vmem>>, %arg8: memref<1x32xf32, #tpu.memory_space<vmem>>, %arg9: memref<1x32xf32, #tpu.memory_space<vmem>>, %arg10: memref<32x64xbf16, #tpu.memory_space<vmem>>, %arg11: memref<1x64xf32, #tpu.memory_space<vmem>>, %arg12: memref<64x32xbf16, #tpu.memory_space<vmem>>, %arg13: memref<1x32xf32, #tpu.memory_space<vmem>>, %arg14: memref<2x8x32xf32, #tpu.memory_space<vmem>>, %arg15: memref<2x8x32xf32, #tpu.memory_space<vmem>>) attributes {dimension_semantics = [#tpu.dimension_semantics<parallel>], iteration_bounds = array<i64: 2>, scalar_prefetch = 0 : i64, scratch_operands = 1 : i64, tpu.core_type = #tpu.core_type<tc>, window_params = [{transform_indices = @transform_0, window_bounds = array<i64: 2, 8, 32>}, {pipeline_mode = #tpu.pipeline_mode<synchronous>, transform_indices = @transform_1, window_bounds = array<i64: 1, 32>}, {pipeline_mode = #tpu.pipeline_mode<synchronous>, transform_indices = @transform_2, window_bounds = array<i64: 1, 32>}, {pipeline_mode = #tpu.pipeline_mode<synchronous>, transform_indices = @transform_3, window_bounds = array<i64: 16, 8>}, {pipeline_mode = #tpu.pipeline_mode<synchronous>, transform_indices = @transform_4, window_bounds = array<i64: 16, 1>}, {pipeline_mode = #tpu.pipeline_mode<synchronous>, transform_indices = @transform_5, window_bounds = array<i64: 8, 16>}, {pipeline_mode = #tpu.pipeline_mode<synchronous>, transform_indices = @transform_6, window_bounds = array<i64: 8, 1>}, {pipeline_mode = #tpu.pipeline_mode<synchronous>, transform_indices = @transform_7, window_bounds = array<i64: 1, 32>}, {pipeline_mode = #tpu.pipeline_mode<synchronous>, transform_indices = @transform_8, window_bounds = array<i64: 1, 32>}, {pipeline_mode = #tpu.pipeline_mode<synchronous>, transform_indices = @transform_9, window_bounds = array<i64: 32, 64>}, {pipeline_mode = #tpu.pipeline_mode<synchronous>, transform_indices = @transform_10, window_bounds = array<i64: 1, 64>}, {pipeline_mode = #tpu.pipeline_mode<synchronous>, transform_indices = @transform_11, window_bounds = array<i64: 64, 32>}, {pipeline_mode = #tpu.pipeline_mode<synchronous>, transform_indices = @transform_12, window_bounds = array<i64: 1, 32>}, {transform_indices = @transform_13, window_bounds = array<i64: 2, 8, 32>}]} {
    %c0 = arith.constant 0 : index
    %c0_0 = arith.constant 0 : index
    %0 = vector.load %arg2[%c0, %c0_0] : memref<1x32xf32, #tpu.memory_space<vmem>>, vector<1x32xf32>
    %c0_1 = arith.constant 0 : index
    %c0_2 = arith.constant 0 : index
    %1 = vector.load %arg3[%c0_1, %c0_2] : memref<1x32xf32, #tpu.memory_space<vmem>>, vector<1x32xf32>
    %c0_3 = arith.constant 0 : index
    %c0_4 = arith.constant 0 : index
    %2 = vector.load %arg4[%c0_3, %c0_4] : memref<16x8xbf16, #tpu.memory_space<vmem>>, vector<16x8xbf16>
    %c0_5 = arith.constant 0 : index
    %c0_6 = arith.constant 0 : index
    %3 = vector.load %arg5[%c0_5, %c0_6] : memref<16x1xf32, #tpu.memory_space<vmem>>, vector<16x1xf32>
    %c0_7 = arith.constant 0 : index
    %c0_8 = arith.constant 0 : index
    %4 = vector.load %arg6[%c0_7, %c0_8] : memref<8x16xbf16, #tpu.memory_space<vmem>>, vector<8x16xbf16>
    %c0_9 = arith.constant 0 : index
    %c0_10 = arith.constant 0 : index
    %5 = vector.load %arg7[%c0_9, %c0_10] : memref<8x1xf32, #tpu.memory_space<vmem>>, vector<8x1xf32>
    %c0_i32 = arith.constant 0 : i32
    %6 = arith.index_cast %c0_i32 : i32 to index
    %c0_11 = arith.constant 0 : index
    %c0_12 = arith.constant 0 : index
    %7 = vector.load %arg1[%6, %c0_11, %c0_12] : memref<2x8x32xf32, #tpu.memory_space<vmem>>, vector<1x8x32xf32>
    %8 = vector.shape_cast %7 : vector<1x8x32xf32> to vector<8x32xf32>
    %cst = arith.constant dense<0.000000e+00> : vector<8xf32>
    %9 = vector.multi_reduction <add>, %8, %cst [1] : vector<8x32xf32> to vector<8xf32>
    %10 = vector.shape_cast %9 : vector<8xf32> to vector<8x1xf32>
    %cst_13 = arith.constant 3.200000e+01 : f32
    %11 = vector.broadcast %cst_13 : f32 to vector<8x1xf32>
    %12 = arith.divf %10, %11 : vector<8x1xf32>
    %13 = vector.broadcast %12 : vector<8x1xf32> to vector<8x32xf32>
    %14 = arith.subf %8, %13 : vector<8x32xf32>
    %15 = arith.mulf %14, %14 : vector<8x32xf32>
    %cst_14 = arith.constant dense<0.000000e+00> : vector<8xf32>
    %16 = vector.multi_reduction <add>, %15, %cst_14 [1] : vector<8x32xf32> to vector<8xf32>
    %17 = vector.shape_cast %16 : vector<8xf32> to vector<8x1xf32>
    %cst_15 = arith.constant 3.200000e+01 : f32
    %18 = vector.broadcast %cst_15 : f32 to vector<8x1xf32>
    %19 = arith.divf %17, %18 : vector<8x1xf32>
    %20 = vector.broadcast %12 : vector<8x1xf32> to vector<8x32xf32>
    %21 = arith.subf %8, %20 : vector<8x32xf32>
    %cst_16 = arith.constant 9.99999974E-6 : f32
    %22 = vector.broadcast %cst_16 : f32 to vector<8x1xf32>
    %23 = arith.addf %19, %22 : vector<8x1xf32>
    %24 = math.rsqrt %23 : vector<8x1xf32>
    %25 = vector.broadcast %24 : vector<8x1xf32> to vector<8x32xf32>
    %26 = arith.mulf %21, %25 : vector<8x32xf32>
    %27 = vector.broadcast %0 : vector<1x32xf32> to vector<8x32xf32>
    %28 = arith.mulf %26, %27 : vector<8x32xf32>
    %29 = vector.broadcast %1 : vector<1x32xf32> to vector<8x32xf32>
    %30 = arith.addf %28, %29 : vector<8x32xf32>
    %31 = arith.truncf %30 : vector<8x32xf32> to vector<8x32xbf16>
    %cst_17 = arith.constant dense<0.000000e+00> : vector<16x32xf32>
    %32 = tpu.matmul %2, %31, %cst_17 {dimension_numbers = #tpu.dot_dimension_numbers<[1], [0], [0], [1], [0, 0, 1, 1], [], []>} : vector<16x8xbf16>, vector<8x32xbf16>, vector<16x32xf32> -> vector<16x32xf32>
    %33 = vector.broadcast %3 : vector<16x1xf32> to vector<16x32xf32>
    %34 = arith.addf %32, %33 : vector<16x32xf32>
    %cst_18 = arith.constant 5.000000e-01 : f32
    %35 = vector.broadcast %cst_18 : f32 to vector<16x32xf32>
    %36 = arith.mulf %35, %34 : vector<16x32xf32>
    %cst_19 = arith.constant 0.707106769 : f32
    %37 = vector.broadcast %cst_19 : f32 to vector<16x32xf32>
    %38 = arith.mulf %34, %37 : vector<16x32xf32>
    %39 = math.erf %38 : vector<16x32xf32>
    %cst_20 = arith.constant 1.000000e+00 : f32
    %40 = vector.broadcast %cst_20 : f32 to vector<16x32xf32>
    %41 = arith.addf %40, %39 : vector<16x32xf32>
    %42 = arith.mulf %36, %41 : vector<16x32xf32>
    %43 = arith.truncf %42 : vector<16x32xf32> to vector<16x32xbf16>
    %cst_21 = arith.constant dense<0.000000e+00> : vector<8x32xf32>
    %44 = tpu.matmul %4, %43, %cst_21 {dimension_numbers = #tpu.dot_dimension_numbers<[1], [0], [0], [1], [0, 0, 1, 1], [], []>} : vector<8x16xbf16>, vector<16x32xbf16>, vector<8x32xf32> -> vector<8x32xf32>
    %45 = arith.addf %8, %44 : vector<8x32xf32>
    %46 = vector.broadcast %5 : vector<8x1xf32> to vector<8x32xf32>
    %47 = arith.addf %45, %46 : vector<8x32xf32>
    %48 = arith.index_cast %c0_i32 : i32 to index
    %c0_22 = arith.constant 0 : index
    %c0_23 = arith.constant 0 : index
    %49 = vector.load %arg15[%48, %c0_22, %c0_23] : memref<2x8x32xf32, #tpu.memory_space<vmem>>, vector<1x8x32xf32>
    %50 = vector.shape_cast %49 : vector<1x8x32xf32> to vector<8x32xf32>
    %51 = vector.shape_cast %47 : vector<8x32xf32> to vector<1x8x32xf32>
    tpu.vector_store %arg15[%48, %c0_22, %c0_23], %51 {strides = array<i32>} : memref<2x8x32xf32, #tpu.memory_space<vmem>>, vector<1x8x32xf32>,
    %c1_i32 = arith.constant 1 : i32
    %52 = arith.index_cast %c1_i32 : i32 to index
    %c0_24 = arith.constant 0 : index
    %c0_25 = arith.constant 0 : index
    %53 = vector.load %arg1[%52, %c0_24, %c0_25] : memref<2x8x32xf32, #tpu.memory_space<vmem>>, vector<1x8x32xf32>
    %54 = vector.shape_cast %53 : vector<1x8x32xf32> to vector<8x32xf32>
    %cst_26 = arith.constant dense<0.000000e+00> : vector<8xf32>
    %55 = vector.multi_reduction <add>, %54, %cst_26 [1] : vector<8x32xf32> to vector<8xf32>
    %56 = vector.shape_cast %55 : vector<8xf32> to vector<8x1xf32>
    %cst_27 = arith.constant 3.200000e+01 : f32
    %57 = vector.broadcast %cst_27 : f32 to vector<8x1xf32>
    %58 = arith.divf %56, %57 : vector<8x1xf32>
    %59 = vector.broadcast %58 : vector<8x1xf32> to vector<8x32xf32>
    %60 = arith.subf %54, %59 : vector<8x32xf32>
    %61 = arith.mulf %60, %60 : vector<8x32xf32>
    %cst_28 = arith.constant dense<0.000000e+00> : vector<8xf32>
    %62 = vector.multi_reduction <add>, %61, %cst_28 [1] : vector<8x32xf32> to vector<8xf32>
    %63 = vector.shape_cast %62 : vector<8xf32> to vector<8x1xf32>
    %cst_29 = arith.constant 3.200000e+01 : f32
    %64 = vector.broadcast %cst_29 : f32 to vector<8x1xf32>
    %65 = arith.divf %63, %64 : vector<8x1xf32>
    %66 = vector.broadcast %58 : vector<8x1xf32> to vector<8x32xf32>
    %67 = arith.subf %54, %66 : vector<8x32xf32>
    %cst_30 = arith.constant 9.99999974E-6 : f32
    %68 = vector.broadcast %cst_30 : f32 to vector<8x1xf32>
    %69 = arith.addf %65, %68 : vector<8x1xf32>
    %70 = math.rsqrt %69 : vector<8x1xf32>
    %71 = vector.broadcast %70 : vector<8x1xf32> to vector<8x32xf32>
    %72 = arith.mulf %67, %71 : vector<8x32xf32>
    %73 = vector.broadcast %0 : vector<1x32xf32> to vector<8x32xf32>
    %74 = arith.mulf %72, %73 : vector<8x32xf32>
    %75 = vector.broadcast %1 : vector<1x32xf32> to vector<8x32xf32>
    %76 = arith.addf %74, %75 : vector<8x32xf32>
    %77 = arith.truncf %76 : vector<8x32xf32> to vector<8x32xbf16>
    %cst_31 = arith.constant dense<0.000000e+00> : vector<16x32xf32>
    %78 = tpu.matmul %2, %77, %cst_31 {dimension_numbers = #tpu.dot_dimension_numbers<[1], [0], [0], [1], [0, 0, 1, 1], [], []>} : vector<16x8xbf16>, vector<8x32xbf16>, vector<16x32xf32> -> vector<16x32xf32>
    %79 = vector.broadcast %3 : vector<16x1xf32> to vector<16x32xf32>
    %80 = arith.addf %78, %79 : vector<16x32xf32>
    %cst_32 = arith.constant 5.000000e-01 : f32
    %81 = vector.broadcast %cst_32 : f32 to vector<16x32xf32>
    %82 = arith.mulf %81, %80 : vector<16x32xf32>
    %cst_33 = arith.constant 0.707106769 : f32
    %83 = vector.broadcast %cst_33 : f32 to vector<16x32xf32>
    %84 = arith.mulf %80, %83 : vector<16x32xf32>
    %85 = math.erf %84 : vector<16x32xf32>
    %cst_34 = arith.constant 1.000000e+00 : f32
    %86 = vector.broadcast %cst_34 : f32 to vector<16x32xf32>
    %87 = arith.addf %86, %85 : vector<16x32xf32>
    %88 = arith.mulf %82, %87 : vector<16x32xf32>
    %89 = arith.truncf %88 : vector<16x32xf32> to vector<16x32xbf16>
    %cst_35 = arith.constant dense<0.000000e+00> : vector<8x32xf32>
    %90 = tpu.matmul %4, %89, %cst_35 {dimension_numbers = #tpu.dot_dimension_numbers<[1], [0], [0], [1], [0, 0, 1, 1], [], []>} : vector<8x16xbf16>, vector<16x32xbf16>, vector<8x32xf32> -> vector<8x32xf32>
    %91 = arith.addf %54, %90 : vector<8x32xf32>
    %92 = vector.broadcast %5 : vector<8x1xf32> to vector<8x32xf32>
    %93 = arith.addf %91, %92 : vector<8x32xf32>
    %94 = arith.index_cast %c1_i32 : i32 to index
    %c0_36 = arith.constant 0 : index
    %c0_37 = arith.constant 0 : index
    %95 = vector.load %arg15[%94, %c0_36, %c0_37] : memref<2x8x32xf32, #tpu.memory_space<vmem>>, vector<1x8x32xf32>
    %96 = vector.shape_cast %95 : vector<1x8x32xf32> to vector<8x32xf32>
    %97 = vector.shape_cast %93 : vector<8x32xf32> to vector<1x8x32xf32>
    tpu.vector_store %arg15[%94, %c0_36, %c0_37], %97 {strides = array<i32>} : memref<2x8x32xf32, #tpu.memory_space<vmem>>, vector<1x8x32xf32>,
    %c2_i32 = arith.constant 2 : i32
    %c0_38 = arith.constant 0 : index
    %c0_39 = arith.constant 0 : index
    %c0_40 = arith.constant 0 : index
    %98 = vector.load %arg15[%c0_38, %c0_39, %c0_40] : memref<2x8x32xf32, #tpu.memory_space<vmem>>, vector<2x8x32xf32>
    %99 = vector.shape_cast %98 : vector<2x8x32xf32> to vector<16x32xf32>
    %c0_41 = arith.constant 0 : index
    %c0_42 = arith.constant 0 : index
    %100 = vector.load %arg8[%c0_41, %c0_42] : memref<1x32xf32, #tpu.memory_space<vmem>>, vector<1x32xf32>
    %c0_43 = arith.constant 0 : index
    %c0_44 = arith.constant 0 : index
    %101 = vector.load %arg9[%c0_43, %c0_44] : memref<1x32xf32, #tpu.memory_space<vmem>>, vector<1x32xf32>
    %cst_45 = arith.constant dense<0.000000e+00> : vector<16xf32>
    %102 = vector.multi_reduction <add>, %99, %cst_45 [1] : vector<16x32xf32> to vector<16xf32>
    %103 = vector.shape_cast %102 : vector<16xf32> to vector<16x1xf32>
    %cst_46 = arith.constant 3.200000e+01 : f32
    %104 = vector.broadcast %cst_46 : f32 to vector<16x1xf32>
    %105 = arith.divf %103, %104 : vector<16x1xf32>
    %106 = vector.broadcast %105 : vector<16x1xf32> to vector<16x32xf32>
    %107 = arith.subf %99, %106 : vector<16x32xf32>
    %108 = arith.mulf %107, %107 : vector<16x32xf32>
    %cst_47 = arith.constant dense<0.000000e+00> : vector<16xf32>
    %109 = vector.multi_reduction <add>, %108, %cst_47 [1] : vector<16x32xf32> to vector<16xf32>
    %110 = vector.shape_cast %109 : vector<16xf32> to vector<16x1xf32>
    %cst_48 = arith.constant 3.200000e+01 : f32
    %111 = vector.broadcast %cst_48 : f32 to vector<16x1xf32>
    %112 = arith.divf %110, %111 : vector<16x1xf32>
    %113 = vector.broadcast %105 : vector<16x1xf32> to vector<16x32xf32>
    %114 = arith.subf %99, %113 : vector<16x32xf32>
    %cst_49 = arith.constant 9.99999974E-6 : f32
    %115 = vector.broadcast %cst_49 : f32 to vector<16x1xf32>
    %116 = arith.addf %112, %115 : vector<16x1xf32>
    %117 = math.rsqrt %116 : vector<16x1xf32>
    %118 = vector.broadcast %117 : vector<16x1xf32> to vector<16x32xf32>
    %119 = arith.mulf %114, %118 : vector<16x32xf32>
    %120 = vector.broadcast %100 : vector<1x32xf32> to vector<16x32xf32>
    %121 = arith.mulf %119, %120 : vector<16x32xf32>
    %122 = vector.broadcast %101 : vector<1x32xf32> to vector<16x32xf32>
    %123 = arith.addf %121, %122 : vector<16x32xf32>
    %124 = arith.truncf %123 : vector<16x32xf32> to vector<16x32xbf16>
    %c0_50 = arith.constant 0 : index
    %c0_51 = arith.constant 0 : index
    %125 = vector.load %arg10[%c0_50, %c0_51] : memref<32x64xbf16, #tpu.memory_space<vmem>>, vector<32x64xbf16>
    %cst_52 = arith.constant dense<0.000000e+00> : vector<16x64xf32>
    %126 = tpu.matmul %124, %125, %cst_52 {dimension_numbers = #tpu.dot_dimension_numbers<[1], [0], [0], [1], [0, 0, 1, 1], [], []>} : vector<16x32xbf16>, vector<32x64xbf16>, vector<16x64xf32> -> vector<16x64xf32>
    %c0_53 = arith.constant 0 : index
    %c0_54 = arith.constant 0 : index
    %127 = vector.load %arg11[%c0_53, %c0_54] : memref<1x64xf32, #tpu.memory_space<vmem>>, vector<1x64xf32>
    %128 = vector.broadcast %127 : vector<1x64xf32> to vector<16x64xf32>
    %129 = arith.addf %126, %128 : vector<16x64xf32>
    %cst_55 = arith.constant 5.000000e-01 : f32
    %130 = vector.broadcast %cst_55 : f32 to vector<16x64xf32>
    %131 = arith.mulf %130, %129 : vector<16x64xf32>
    %cst_56 = arith.constant 0.707106769 : f32
    %132 = vector.broadcast %cst_56 : f32 to vector<16x64xf32>
    %133 = arith.mulf %129, %132 : vector<16x64xf32>
    %134 = math.erf %133 : vector<16x64xf32>
    %cst_57 = arith.constant 1.000000e+00 : f32
    %135 = vector.broadcast %cst_57 : f32 to vector<16x64xf32>
    %136 = arith.addf %135, %134 : vector<16x64xf32>
    %137 = arith.mulf %131, %136 : vector<16x64xf32>
    %138 = arith.truncf %137 : vector<16x64xf32> to vector<16x64xbf16>
    %c0_58 = arith.constant 0 : index
    %c0_59 = arith.constant 0 : index
    %139 = vector.load %arg12[%c0_58, %c0_59] : memref<64x32xbf16, #tpu.memory_space<vmem>>, vector<64x32xbf16>
    %cst_60 = arith.constant dense<0.000000e+00> : vector<16x32xf32>
    %140 = tpu.matmul %138, %139, %cst_60 {dimension_numbers = #tpu.dot_dimension_numbers<[1], [0], [0], [1], [0, 0, 1, 1], [], []>} : vector<16x64xbf16>, vector<64x32xbf16>, vector<16x32xf32> -> vector<16x32xf32>
    %c0_61 = arith.constant 0 : index
    %c0_62 = arith.constant 0 : index
    %141 = vector.load %arg13[%c0_61, %c0_62] : memref<1x32xf32, #tpu.memory_space<vmem>>, vector<1x32xf32>
    %142 = vector.broadcast %141 : vector<1x32xf32> to vector<16x32xf32>
    %143 = arith.addf %140, %142 : vector<16x32xf32>
    %144 = arith.addf %99, %143 : vector<16x32xf32>
    %145 = vector.shape_cast %144 : vector<16x32xf32> to vector<2x8x32xf32>
    %c0_63 = arith.constant 0 : index
    %c0_64 = arith.constant 0 : index
    %c0_65 = arith.constant 0 : index
    %146 = vector.load %arg14[%c0_63, %c0_64, %c0_65] : memref<2x8x32xf32, #tpu.memory_space<vmem>>, vector<2x8x32xf32>
    tpu.vector_store %arg14[%c0_63, %c0_64, %c0_65], %145 {strides = array<i32>} : memref<2x8x32xf32, #tpu.memory_space<vmem>>, vector<2x8x32xf32>,
    return
  }
  func.func @transform_0(%arg0: i32) -> (i32, i32, i32) {
    %c0_i32 = arith.constant 0 : i32
    %c0_i32_0 = arith.constant 0 : i32
    %c0_i32_1 = arith.constant 0 : i32
    return %arg0, %c0_i32, %c0_i32_0 : i32, i32, i32
  }
  func.func @transform_1(%arg0: i32) -> (i32, i32) {
    %c0_i32 = arith.constant 0 : i32
    %c0_i32_0 = arith.constant 0 : i32
    %c0_i32_1 = arith.constant 0 : i32
    return %c0_i32, %c0_i32_0 : i32, i32
  }
  func.func @transform_2(%arg0: i32) -> (i32, i32) {
    %c0_i32 = arith.constant 0 : i32
    %c0_i32_0 = arith.constant 0 : i32
    %c0_i32_1 = arith.constant 0 : i32
    return %c0_i32, %c0_i32_0 : i32, i32
  }
  func.func @transform_3(%arg0: i32) -> (i32, i32) {
    %c0_i32 = arith.constant 0 : i32
    %c0_i32_0 = arith.constant 0 : i32
    %c0_i32_1 = arith.constant 0 : i32
    return %c0_i32, %c0_i32_0 : i32, i32
  }
  func.func @transform_4(%arg0: i32) -> (i32, i32) {
    %c0_i32 = arith.constant 0 : i32
    %c0_i32_0 = arith.constant 0 : i32
    %c0_i32_1 = arith.constant 0 : i32
    return %c0_i32, %c0_i32_0 : i32, i32
  }
  func.func @transform_5(%arg0: i32) -> (i32, i32) {
    %c0_i32 = arith.constant 0 : i32
    %c0_i32_0 = arith.constant 0 : i32
    %c0_i32_1 = arith.constant 0 : i32
    return %c0_i32, %c0_i32_0 : i32, i32
  }
  func.func @transform_6(%arg0: i32) -> (i32, i32) {
    %c0_i32 = arith.constant 0 : i32
    %c0_i32_0 = arith.constant 0 : i32
    %c0_i32_1 = arith.constant 0 : i32
    return %c0_i32, %c0_i32_0 : i32, i32
  }
  func.func @transform_7(%arg0: i32) -> (i32, i32) {
    %c0_i32 = arith.constant 0 : i32
    %c0_i32_0 = arith.constant 0 : i32
    %c0_i32_1 = arith.constant 0 : i32
    return %c0_i32, %c0_i32_0 : i32, i32
  }
  func.func @transform_8(%arg0: i32) -> (i32, i32) {
    %c0_i32 = arith.constant 0 : i32
    %c0_i32_0 = arith.constant 0 : i32
    %c0_i32_1 = arith.constant 0 : i32
    return %c0_i32, %c0_i32_0 : i32, i32
  }
  func.func @transform_9(%arg0: i32) -> (i32, i32) {
    %c0_i32 = arith.constant 0 : i32
    %c0_i32_0 = arith.constant 0 : i32
    %c0_i32_1 = arith.constant 0 : i32
    return %c0_i32, %c0_i32_0 : i32, i32
  }
  func.func @transform_10(%arg0: i32) -> (i32, i32) {
    %c0_i32 = arith.constant 0 : i32
    %c0_i32_0 = arith.constant 0 : i32
    %c0_i32_1 = arith.constant 0 : i32
    return %c0_i32, %c0_i32_0 : i32, i32
  }
  func.func @transform_11(%arg0: i32) -> (i32, i32) {
    %c0_i32 = arith.constant 0 : i32
    %c0_i32_0 = arith.constant 0 : i32
    %c0_i32_1 = arith.constant 0 : i32
    return %c0_i32, %c0_i32_0 : i32, i32
  }
  func.func @transform_12(%arg0: i32) -> (i32, i32) {
    %c0_i32 = arith.constant 0 : i32
    %c0_i32_0 = arith.constant 0 : i32
    %c0_i32_1 = arith.constant 0 : i32
    return %c0_i32, %c0_i32_0 : i32, i32
  }
  func.func @transform_13(%arg0: i32) -> (i32, i32, i32) {
    %c0_i32 = arith.constant 0 : i32
    %c0_i32_0 = arith.constant 0 : i32
    %c0_i32_1 = arith.constant 0 : i32
    return %arg0, %c0_i32, %c0_i32_0 : i32, i32, i32
  }
}

module attributes {stable_mosaic.version = 11 : i64} {
  func.func @mixer_block_kernel(%arg0: i32, %arg1: memref<2x8x32xf32, #tpu.memory_space<vmem>>, %arg2: memref<1x32xf32, #tpu.memory_space<vmem>>, %arg3: memref<1x32xf32, #tpu.memory_space<vmem>>, %arg4: memref<16x8xbf16, #tpu.memory_space<vmem>>, %arg5: memref<16x1xf32, #tpu.memory_space<vmem>>, %arg6: memref<8x16xbf16, #tpu.memory_space<vmem>>, %arg7: memref<8x1xf32, #tpu.memory_space<vmem>>, %arg8: memref<1x32xf32, #tpu.memory_space<vmem>>, %arg9: memref<1x32xf32, #tpu.memory_space<vmem>>, %arg10: memref<32x64xbf16, #tpu.memory_space<vmem>>, %arg11: memref<1x64xf32, #tpu.memory_space<vmem>>, %arg12: memref<64x32xbf16, #tpu.memory_space<vmem>>, %arg13: memref<1x32xf32, #tpu.memory_space<vmem>>, %arg14: memref<2x8x32xf32, #tpu.memory_space<vmem>>, %arg15: memref<2x8x32xf32, #tpu.memory_space<vmem>>) attributes {dimension_semantics = [#tpu.dimension_semantics<parallel>], iteration_bounds = array<i64: 2>, scalar_prefetch = 0 : i64, scratch_operands = 1 : i64, tpu.core_type = #tpu.core_type<tc>, window_params = [{transform_indices = @transform_0, window_bounds = array<i64: 2, 8, 32>}, {pipeline_mode = #tpu.pipeline_mode<synchronous>, transform_indices = @transform_1, window_bounds = array<i64: 1, 32>}, {pipeline_mode = #tpu.pipeline_mode<synchronous>, transform_indices = @transform_2, window_bounds = array<i64: 1, 32>}, {pipeline_mode = #tpu.pipeline_mode<synchronous>, transform_indices = @transform_3, window_bounds = array<i64: 16, 8>}, {pipeline_mode = #tpu.pipeline_mode<synchronous>, transform_indices = @transform_4, window_bounds = array<i64: 16, 1>}, {pipeline_mode = #tpu.pipeline_mode<synchronous>, transform_indices = @transform_5, window_bounds = array<i64: 8, 16>}, {pipeline_mode = #tpu.pipeline_mode<synchronous>, transform_indices = @transform_6, window_bounds = array<i64: 8, 1>}, {pipeline_mode = #tpu.pipeline_mode<synchronous>, transform_indices = @transform_7, window_bounds = array<i64: 1, 32>}, {pipeline_mode = #tpu.pipeline_mode<synchronous>, transform_indices = @transform_8, window_bounds = array<i64: 1, 32>}, {pipeline_mode = #tpu.pipeline_mode<synchronous>, transform_indices = @transform_9, window_bounds = array<i64: 32, 64>}, {pipeline_mode = #tpu.pipeline_mode<synchronous>, transform_indices = @transform_10, window_bounds = array<i64: 1, 64>}, {pipeline_mode = #tpu.pipeline_mode<synchronous>, transform_indices = @transform_11, window_bounds = array<i64: 64, 32>}, {pipeline_mode = #tpu.pipeline_mode<synchronous>, transform_indices = @transform_12, window_bounds = array<i64: 1, 32>}, {transform_indices = @transform_13, window_bounds = array<i64: 2, 8, 32>}]} {
    %c0 = arith.constant 0 : index
    %c0_0 = arith.constant 0 : index
    %0 = vector.load %arg2[%c0, %c0_0] : memref<1x32xf32, #tpu.memory_space<vmem>>, vector<1x32xf32>
    %c0_1 = arith.constant 0 : index
    %c0_2 = arith.constant 0 : index
    %1 = vector.load %arg3[%c0_1, %c0_2] : memref<1x32xf32, #tpu.memory_space<vmem>>, vector<1x32xf32>
    %c0_3 = arith.constant 0 : index
    %c0_4 = arith.constant 0 : index
    %2 = vector.load %arg4[%c0_3, %c0_4] : memref<16x8xbf16, #tpu.memory_space<vmem>>, vector<16x8xbf16>
    %c0_5 = arith.constant 0 : index
    %c0_6 = arith.constant 0 : index
    %3 = vector.load %arg5[%c0_5, %c0_6] : memref<16x1xf32, #tpu.memory_space<vmem>>, vector<16x1xf32>
    %c0_7 = arith.constant 0 : index
    %c0_8 = arith.constant 0 : index
    %4 = vector.load %arg6[%c0_7, %c0_8] : memref<8x16xbf16, #tpu.memory_space<vmem>>, vector<8x16xbf16>
    %c0_9 = arith.constant 0 : index
    %c0_10 = arith.constant 0 : index
    %5 = vector.load %arg7[%c0_9, %c0_10] : memref<8x1xf32, #tpu.memory_space<vmem>>, vector<8x1xf32>
    %c0_i32 = arith.constant 0 : i32
    %6 = arith.index_cast %c0_i32 : i32 to index
    %c0_11 = arith.constant 0 : index
    %c0_12 = arith.constant 0 : index
    %7 = vector.load %arg1[%6, %c0_11, %c0_12] : memref<2x8x32xf32, #tpu.memory_space<vmem>>, vector<1x8x32xf32>
    %8 = vector.shape_cast %7 : vector<1x8x32xf32> to vector<8x32xf32>
    %cst = arith.constant dense<0.000000e+00> : vector<8xf32>
    %9 = vector.multi_reduction <add>, %8, %cst [1] : vector<8x32xf32> to vector<8xf32>
    %10 = vector.shape_cast %9 : vector<8xf32> to vector<8x1xf32>
    %cst_13 = arith.constant 3.200000e+01 : f32
    %11 = vector.broadcast %cst_13 : f32 to vector<8x1xf32>
    %12 = arith.divf %10, %11 : vector<8x1xf32>
    %13 = vector.broadcast %12 : vector<8x1xf32> to vector<8x32xf32>
    %14 = arith.subf %8, %13 : vector<8x32xf32>
    %15 = arith.mulf %14, %14 : vector<8x32xf32>
    %cst_14 = arith.constant dense<0.000000e+00> : vector<8xf32>
    %16 = vector.multi_reduction <add>, %15, %cst_14 [1] : vector<8x32xf32> to vector<8xf32>
    %17 = vector.shape_cast %16 : vector<8xf32> to vector<8x1xf32>
    %cst_15 = arith.constant 3.200000e+01 : f32
    %18 = vector.broadcast %cst_15 : f32 to vector<8x1xf32>
    %19 = arith.divf %17, %18 : vector<8x1xf32>
    %20 = vector.broadcast %12 : vector<8x1xf32> to vector<8x32xf32>
    %21 = arith.subf %8, %20 : vector<8x32xf32>
    %cst_16 = arith.constant 9.99999974E-6 : f32
    %22 = vector.broadcast %cst_16 : f32 to vector<8x1xf32>
    %23 = arith.addf %19, %22 : vector<8x1xf32>
    %24 = math.rsqrt %23 : vector<8x1xf32>
    %25 = vector.broadcast %24 : vector<8x1xf32> to vector<8x32xf32>
    %26 = arith.mulf %21, %25 : vector<8x32xf32>
    %27 = vector.broadcast %0 : vector<1x32xf32> to vector<8x32xf32>
    %28 = arith.mulf %26, %27 : vector<8x32xf32>
    %29 = vector.broadcast %1 : vector<1x32xf32> to vector<8x32xf32>
    %30 = arith.addf %28, %29 : vector<8x32xf32>
    %31 = arith.truncf %30 : vector<8x32xf32> to vector<8x32xbf16>
    %cst_17 = arith.constant dense<0.000000e+00> : vector<16x32xf32>
    %32 = tpu.matmul %2, %31, %cst_17 {dimension_numbers = #tpu.dot_dimension_numbers<[1], [0], [0], [1], [0, 0, 1, 1], [], []>} : vector<16x8xbf16>, vector<8x32xbf16>, vector<16x32xf32> -> vector<16x32xf32>
    %33 = vector.broadcast %3 : vector<16x1xf32> to vector<16x32xf32>
    %34 = arith.addf %32, %33 : vector<16x32xf32>
    %cst_18 = arith.constant 5.000000e-01 : f32
    %35 = vector.broadcast %cst_18 : f32 to vector<16x32xf32>
    %36 = arith.mulf %35, %34 : vector<16x32xf32>
    %cst_19 = arith.constant 0.707106769 : f32
    %37 = vector.broadcast %cst_19 : f32 to vector<16x32xf32>
    %38 = arith.mulf %34, %37 : vector<16x32xf32>
    %39 = math.erf %38 : vector<16x32xf32>
    %cst_20 = arith.constant 1.000000e+00 : f32
    %40 = vector.broadcast %cst_20 : f32 to vector<16x32xf32>
    %41 = arith.addf %40, %39 : vector<16x32xf32>
    %42 = arith.mulf %36, %41 : vector<16x32xf32>
    %43 = arith.truncf %42 : vector<16x32xf32> to vector<16x32xbf16>
    %cst_21 = arith.constant dense<0.000000e+00> : vector<8x32xf32>
    %44 = tpu.matmul %4, %43, %cst_21 {dimension_numbers = #tpu.dot_dimension_numbers<[1], [0], [0], [1], [0, 0, 1, 1], [], []>} : vector<8x16xbf16>, vector<16x32xbf16>, vector<8x32xf32> -> vector<8x32xf32>
    %45 = arith.addf %8, %44 : vector<8x32xf32>
    %46 = vector.broadcast %5 : vector<8x1xf32> to vector<8x32xf32>
    %47 = arith.addf %45, %46 : vector<8x32xf32>
    %48 = arith.index_cast %c0_i32 : i32 to index
    %c0_22 = arith.constant 0 : index
    %c0_23 = arith.constant 0 : index
    %49 = vector.load %arg15[%48, %c0_22, %c0_23] : memref<2x8x32xf32, #tpu.memory_space<vmem>>, vector<1x8x32xf32>
    %50 = vector.shape_cast %49 : vector<1x8x32xf32> to vector<8x32xf32>
    %51 = vector.shape_cast %47 : vector<8x32xf32> to vector<1x8x32xf32>
    tpu.vector_store %arg15[%48, %c0_22, %c0_23], %51 {strides = array<i32>} : memref<2x8x32xf32, #tpu.memory_space<vmem>>, vector<1x8x32xf32>,
    %c1_i32 = arith.constant 1 : i32
    %52 = arith.index_cast %c1_i32 : i32 to index
    %c0_24 = arith.constant 0 : index
    %c0_25 = arith.constant 0 : index
    %53 = vector.load %arg1[%52, %c0_24, %c0_25] : memref<2x8x32xf32, #tpu.memory_space<vmem>>, vector<1x8x32xf32>
    %54 = vector.shape_cast %53 : vector<1x8x32xf32> to vector<8x32xf32>
    %cst_26 = arith.constant dense<0.000000e+00> : vector<8xf32>
    %55 = vector.multi_reduction <add>, %54, %cst_26 [1] : vector<8x32xf32> to vector<8xf32>
    %56 = vector.shape_cast %55 : vector<8xf32> to vector<8x1xf32>
    %cst_27 = arith.constant 3.200000e+01 : f32
    %57 = vector.broadcast %cst_27 : f32 to vector<8x1xf32>
    %58 = arith.divf %56, %57 : vector<8x1xf32>
    %59 = vector.broadcast %58 : vector<8x1xf32> to vector<8x32xf32>
    %60 = arith.subf %54, %59 : vector<8x32xf32>
    %61 = arith.mulf %60, %60 : vector<8x32xf32>
    %cst_28 = arith.constant dense<0.000000e+00> : vector<8xf32>
    %62 = vector.multi_reduction <add>, %61, %cst_28 [1] : vector<8x32xf32> to vector<8xf32>
    %63 = vector.shape_cast %62 : vector<8xf32> to vector<8x1xf32>
    %cst_29 = arith.constant 3.200000e+01 : f32
    %64 = vector.broadcast %cst_29 : f32 to vector<8x1xf32>
    %65 = arith.divf %63, %64 : vector<8x1xf32>
    %66 = vector.broadcast %58 : vector<8x1xf32> to vector<8x32xf32>
    %67 = arith.subf %54, %66 : vector<8x32xf32>
    %cst_30 = arith.constant 9.99999974E-6 : f32
    %68 = vector.broadcast %cst_30 : f32 to vector<8x1xf32>
    %69 = arith.addf %65, %68 : vector<8x1xf32>
    %70 = math.rsqrt %69 : vector<8x1xf32>
    %71 = vector.broadcast %70 : vector<8x1xf32> to vector<8x32xf32>
    %72 = arith.mulf %67, %71 : vector<8x32xf32>
    %73 = vector.broadcast %0 : vector<1x32xf32> to vector<8x32xf32>
    %74 = arith.mulf %72, %73 : vector<8x32xf32>
    %75 = vector.broadcast %1 : vector<1x32xf32> to vector<8x32xf32>
    %76 = arith.addf %74, %75 : vector<8x32xf32>
    %77 = arith.truncf %76 : vector<8x32xf32> to vector<8x32xbf16>
    %cst_31 = arith.constant dense<0.000000e+00> : vector<16x32xf32>
    %78 = tpu.matmul %2, %77, %cst_31 {dimension_numbers = #tpu.dot_dimension_numbers<[1], [0], [0], [1], [0, 0, 1, 1], [], []>} : vector<16x8xbf16>, vector<8x32xbf16>, vector<16x32xf32> -> vector<16x32xf32>
    %79 = vector.broadcast %3 : vector<16x1xf32> to vector<16x32xf32>
    %80 = arith.addf %78, %79 : vector<16x32xf32>
    %cst_32 = arith.constant 5.000000e-01 : f32
    %81 = vector.broadcast %cst_32 : f32 to vector<16x32xf32>
    %82 = arith.mulf %81, %80 : vector<16x32xf32>
    %cst_33 = arith.constant 0.707106769 : f32
    %83 = vector.broadcast %cst_33 : f32 to vector<16x32xf32>
    %84 = arith.mulf %80, %83 : vector<16x32xf32>
    %85 = math.erf %84 : vector<16x32xf32>
    %cst_34 = arith.constant 1.000000e+00 : f32
    %86 = vector.broadcast %cst_34 : f32 to vector<16x32xf32>
    %87 = arith.addf %86, %85 : vector<16x32xf32>
    %88 = arith.mulf %82, %87 : vector<16x32xf32>
    %89 = arith.truncf %88 : vector<16x32xf32> to vector<16x32xbf16>
    %cst_35 = arith.constant dense<0.000000e+00> : vector<8x32xf32>
    %90 = tpu.matmul %4, %89, %cst_35 {dimension_numbers = #tpu.dot_dimension_numbers<[1], [0], [0], [1], [0, 0, 1, 1], [], []>} : vector<8x16xbf16>, vector<16x32xbf16>, vector<8x32xf32> -> vector<8x32xf32>
    %91 = arith.addf %54, %90 : vector<8x32xf32>
    %92 = vector.broadcast %5 : vector<8x1xf32> to vector<8x32xf32>
    %93 = arith.addf %91, %92 : vector<8x32xf32>
    %94 = arith.index_cast %c1_i32 : i32 to index
    %c0_36 = arith.constant 0 : index
    %c0_37 = arith.constant 0 : index
    %95 = vector.load %arg15[%94, %c0_36, %c0_37] : memref<2x8x32xf32, #tpu.memory_space<vmem>>, vector<1x8x32xf32>
    %96 = vector.shape_cast %95 : vector<1x8x32xf32> to vector<8x32xf32>
    %97 = vector.shape_cast %93 : vector<8x32xf32> to vector<1x8x32xf32>
    tpu.vector_store %arg15[%94, %c0_36, %c0_37], %97 {strides = array<i32>} : memref<2x8x32xf32, #tpu.memory_space<vmem>>, vector<1x8x32xf32>,
    %c2_i32 = arith.constant 2 : i32
    %c0_38 = arith.constant 0 : index
    %c0_39 = arith.constant 0 : index
    %c0_40 = arith.constant 0 : index
    %98 = vector.load %arg15[%c0_38, %c0_39, %c0_40] : memref<2x8x32xf32, #tpu.memory_space<vmem>>, vector<2x8x32xf32>
    %99 = vector.shape_cast %98 : vector<2x8x32xf32> to vector<16x32xf32>
    %c0_41 = arith.constant 0 : index
    %c0_42 = arith.constant 0 : index
    %100 = vector.load %arg8[%c0_41, %c0_42] : memref<1x32xf32, #tpu.memory_space<vmem>>, vector<1x32xf32>
    %c0_43 = arith.constant 0 : index
    %c0_44 = arith.constant 0 : index
    %101 = vector.load %arg9[%c0_43, %c0_44] : memref<1x32xf32, #tpu.memory_space<vmem>>, vector<1x32xf32>
    %cst_45 = arith.constant dense<0.000000e+00> : vector<16xf32>
    %102 = vector.multi_reduction <add>, %99, %cst_45 [1] : vector<16x32xf32> to vector<16xf32>
    %103 = vector.shape_cast %102 : vector<16xf32> to vector<16x1xf32>
    %cst_46 = arith.constant 3.200000e+01 : f32
    %104 = vector.broadcast %cst_46 : f32 to vector<16x1xf32>
    %105 = arith.divf %103, %104 : vector<16x1xf32>
    %106 = vector.broadcast %105 : vector<16x1xf32> to vector<16x32xf32>
    %107 = arith.subf %99, %106 : vector<16x32xf32>
    %108 = arith.mulf %107, %107 : vector<16x32xf32>
    %cst_47 = arith.constant dense<0.000000e+00> : vector<16xf32>
    %109 = vector.multi_reduction <add>, %108, %cst_47 [1] : vector<16x32xf32> to vector<16xf32>
    %110 = vector.shape_cast %109 : vector<16xf32> to vector<16x1xf32>
    %cst_48 = arith.constant 3.200000e+01 : f32
    %111 = vector.broadcast %cst_48 : f32 to vector<16x1xf32>
    %112 = arith.divf %110, %111 : vector<16x1xf32>
    %113 = vector.broadcast %105 : vector<16x1xf32> to vector<16x32xf32>
    %114 = arith.subf %99, %113 : vector<16x32xf32>
    %cst_49 = arith.constant 9.99999974E-6 : f32
    %115 = vector.broadcast %cst_49 : f32 to vector<16x1xf32>
    %116 = arith.addf %112, %115 : vector<16x1xf32>
    %117 = math.rsqrt %116 : vector<16x1xf32>
    %118 = vector.broadcast %117 : vector<16x1xf32> to vector<16x32xf32>
    %119 = arith.mulf %114, %118 : vector<16x32xf32>
    %120 = vector.broadcast %100 : vector<1x32xf32> to vector<16x32xf32>
    %121 = arith.mulf %119, %120 : vector<16x32xf32>
    %122 = vector.broadcast %101 : vector<1x32xf32> to vector<16x32xf32>
    %123 = arith.addf %121, %122 : vector<16x32xf32>
    %124 = arith.truncf %123 : vector<16x32xf32> to vector<16x32xbf16>
    %c0_50 = arith.constant 0 : index
    %c0_51 = arith.constant 0 : index
    %125 = vector.load %arg10[%c0_50, %c0_51] : memref<32x64xbf16, #tpu.memory_space<vmem>>, vector<32x64xbf16>
    %cst_52 = arith.constant dense<0.000000e+00> : vector<16x64xf32>
    %126 = tpu.matmul %124, %125, %cst_52 {dimension_numbers = #tpu.dot_dimension_numbers<[1], [0], [0], [1], [0, 0, 1, 1], [], []>} : vector<16x32xbf16>, vector<32x64xbf16>, vector<16x64xf32> -> vector<16x64xf32>
    %c0_53 = arith.constant 0 : index
    %c0_54 = arith.constant 0 : index
    %127 = vector.load %arg11[%c0_53, %c0_54] : memref<1x64xf32, #tpu.memory_space<vmem>>, vector<1x64xf32>
    %128 = vector.broadcast %127 : vector<1x64xf32> to vector<16x64xf32>
    %129 = arith.addf %126, %128 : vector<16x64xf32>
    %cst_55 = arith.constant 5.000000e-01 : f32
    %130 = vector.broadcast %cst_55 : f32 to vector<16x64xf32>
    %131 = arith.mulf %130, %129 : vector<16x64xf32>
    %cst_56 = arith.constant 0.707106769 : f32
    %132 = vector.broadcast %cst_56 : f32 to vector<16x64xf32>
    %133 = arith.mulf %129, %132 : vector<16x64xf32>
    %134 = math.erf %133 : vector<16x64xf32>
    %cst_57 = arith.constant 1.000000e+00 : f32
    %135 = vector.broadcast %cst_57 : f32 to vector<16x64xf32>
    %136 = arith.addf %135, %134 : vector<16x64xf32>
    %137 = arith.mulf %131, %136 : vector<16x64xf32>
    %138 = arith.truncf %137 : vector<16x64xf32> to vector<16x64xbf16>
    %c0_58 = arith.constant 0 : index
    %c0_59 = arith.constant 0 : index
    %139 = vector.load %arg12[%c0_58, %c0_59] : memref<64x32xbf16, #tpu.memory_space<vmem>>, vector<64x32xbf16>
    %cst_60 = arith.constant dense<0.000000e+00> : vector<16x32xf32>
    %140 = tpu.matmul %138, %139, %cst_60 {dimension_numbers = #tpu.dot_dimension_numbers<[1], [0], [0], [1], [0, 0, 1, 1], [], []>} : vector<16x64xbf16>, vector<64x32xbf16>, vector<16x32xf32> -> vector<16x32xf32>
    %c0_61 = arith.constant 0 : index
    %c0_62 = arith.constant 0 : index
    %141 = vector.load %arg13[%c0_61, %c0_62] : memref<1x32xf32, #tpu.memory_space<vmem>>, vector<1x32xf32>
    %142 = vector.broadcast %141 : vector<1x32xf32> to vector<16x32xf32>
    %143 = arith.addf %140, %142 : vector<16x32xf32>
    %144 = arith.addf %99, %143 : vector<16x32xf32>
    %145 = vector.shape_cast %144 : vector<16x32xf32> to vector<2x8x32xf32>
    %c0_63 = arith.constant 0 : index
    %c0_64 = arith.constant 0 : index
    %c0_65 = arith.constant 0 : index
    %146 = vector.load %arg14[%c0_63, %c0_64, %c0_65] : memref<2x8x32xf32, #tpu.memory_space<vmem>>, vector<2x8x32xf32>
    tpu.vector_store %arg14[%c0_63, %c0_64, %c0_65], %145 {strides = array<i32>} : memref<2x8x32xf32, #tpu.memory_space<vmem>>, vector<2x8x32xf32>,
    return
  }
  func.func @transform_0(%arg0: i32) -> (i32, i32, i32) {
    %c0_i32 = arith.constant 0 : i32
    %c0_i32_0 = arith.constant 0 : i32
    %c0_i32_1 = arith.constant 0 : i32
    return %arg0, %c0_i32, %c0_i32_0 : i32, i32, i32
  }
  func.func @transform_1(%arg0: i32) -> (i32, i32) {
    %c0_i32 = arith.constant 0 : i32
    %c0_i32_0 = arith.constant 0 : i32
    %c0_i32_1 = arith.constant 0 : i32
    return %c0_i32, %c0_i32_0 : i32, i32
  }
  func.func @transform_2(%arg0: i32) -> (i32, i32) {
    %c0_i32 = arith.constant 0 : i32
    %c0_i32_0 = arith.constant 0 : i32
    %c0_i32_1 = arith.constant 0 : i32
    return %c0_i32, %c0_i32_0 : i32, i32
  }
  func.func @transform_3(%arg0: i32) -> (i32, i32) {
    %c0_i32 = arith.constant 0 : i32
    %c0_i32_0 = arith.constant 0 : i32
    %c0_i32_1 = arith.constant 0 : i32
    return %c0_i32, %c0_i32_0 : i32, i32
  }
  func.func @transform_4(%arg0: i32) -> (i32, i32) {
    %c0_i32 = arith.constant 0 : i32
    %c0_i32_0 = arith.constant 0 : i32
    %c0_i32_1 = arith.constant 0 : i32
    return %c0_i32, %c0_i32_0 : i32, i32
  }
  func.func @transform_5(%arg0: i32) -> (i32, i32) {
    %c0_i32 = arith.constant 0 : i32
    %c0_i32_0 = arith.constant 0 : i32
    %c0_i32_1 = arith.constant 0 : i32
    return %c0_i32, %c0_i32_0 : i32, i32
  }
  func.func @transform_6(%arg0: i32) -> (i32, i32) {
    %c0_i32 = arith.constant 0 : i32
    %c0_i32_0 = arith.constant 0 : i32
    %c0_i32_1 = arith.constant 0 : i32
    return %c0_i32, %c0_i32_0 : i32, i32
  }
  func.func @transform_7(%arg0: i32) -> (i32, i32) {
    %c0_i32 = arith.constant 0 : i32
    %c0_i32_0 = arith.constant 0 : i32
    %c0_i32_1 = arith.constant 0 : i32
    return %c0_i32, %c0_i32_0 : i32, i32
  }
  func.func @transform_8(%arg0: i32) -> (i32, i32) {
    %c0_i32 = arith.constant 0 : i32
    %c0_i32_0 = arith.constant 0 : i32
    %c0_i32_1 = arith.constant 0 : i32
    return %c0_i32, %c0_i32_0 : i32, i32
  }
  func.func @transform_9(%arg0: i32) -> (i32, i32) {
    %c0_i32 = arith.constant 0 : i32
    %c0_i32_0 = arith.constant 0 : i32
    %c0_i32_1 = arith.constant 0 : i32
    return %c0_i32, %c0_i32_0 : i32, i32
  }
  func.func @transform_10(%arg0: i32) -> (i32, i32) {
    %c0_i32 = arith.constant 0 : i32
    %c0_i32_0 = arith.constant 0 : i32
    %c0_i32_1 = arith.constant 0 : i32
    return %c0_i32, %c0_i32_0 : i32, i32
  }
  func.func @transform_11(%arg0: i32) -> (i32, i32) {
    %c0_i32 = arith.constant 0 : i32
    %c0_i32_0 = arith.constant 0 : i32
    %c0_i32_1 = arith.constant 0 : i32
    return %c0_i32, %c0_i32_0 : i32, i32
  }
  func.func @transform_12(%arg0: i32) -> (i32, i32) {
    %c0_i32 = arith.constant 0 : i32
    %c0_i32_0 = arith.constant 0 : i32
    %c0_i32_1 = arith.constant 0 : i32
    return %c0_i32, %c0_i32_0 : i32, i32
  }
  func.func @transform_13(%arg0: i32) -> (i32, i32, i32) {
    %c0_i32 = arith.constant 0 : i32
    %c0_i32_0 = arith.constant 0 : i32
    %c0_i32_1 = arith.constant 0 : i32
    return %arg0, %c0_i32, %c0_i32_0 : i32, i32, i32
  }
}

</mosaic_0001>

<llo_original>
// kernel: tpu_custom_call.1
$region0: #{tpu_custom_call.1}
  #allocation0 [shape = 'u32[]', space=smem, size = 0x4, offset = 0x4, fixed_abs, tag = 'smem constant byte address 0x4 - core index']
  #allocation1 [shape = 'u32[144,128]{1,0:T(1,128)}', space=vmem, size = 0x12000, scoped, tag = 'internal scratch']
  #allocation2 [shape = 'f32[2,8,32]{2,1,0:T(8,128)}', space=vmem, size = 0x2000, scoped, tag = 'scratch operand']
  %s0 = inlined_call_operand.vmem [shape: f32[4,8,32], index: 0, kind: input, shape index: {}]
  %s1 = inlined_call_operand.vmem [shape: f32[1,32], index: 1, kind: input, shape index: {}]
  %s2 = inlined_call_operand.vmem [shape: f32[1,32], index: 2, kind: input, shape index: {}]
  %s3 = inlined_call_operand.vmem [shape: bf16[16,8], index: 3, kind: input, shape index: {}]
  %s4 = inlined_call_operand.vmem [shape: f32[16,1], index: 4, kind: input, shape index: {}]
  %s5 = inlined_call_operand.vmem [shape: bf16[8,16], index: 5, kind: input, shape index: {}]
  %s6 = inlined_call_operand.vmem [shape: f32[8,1], index: 6, kind: input, shape index: {}]
  %s7 = inlined_call_operand.vmem [shape: f32[1,32], index: 7, kind: input, shape index: {}]
  %s8 = inlined_call_operand.vmem [shape: f32[1,32], index: 8, kind: input, shape index: {}]
  %s9 = inlined_call_operand.vmem [shape: bf16[32,64], index: 9, kind: input, shape index: {}]
  %s10 = inlined_call_operand.vmem [shape: f32[1,64], index: 10, kind: input, shape index: {}]
  %s11 = inlined_call_operand.vmem [shape: bf16[64,32], index: 11, kind: input, shape index: {}]
  %s12 = inlined_call_operand.vmem [shape: f32[1,32], index: 12, kind: input, shape index: {}]
  %s13 = inlined_call_operand.hbm [shape: f32[4,8,32], index: 13, kind: output, shape index: {}]
  %s14 = sld [smem:[#allocation0]]
  $region85: #{tpu_custom_call.1} parent=0
    _
  %s16 = ssub.s32 1, %s14
  %s17 = scalar_select 0, %s16, %s14
  $region1: #{tpu_custom_call.1} parent=0
    #allocation3 [shape = 'u8[16384]{0}', space=vmem, size = 0x4000, scoped, tag = 'output window, operand 0']
    #allocation4 [shape = 's32[2]{0}', space=sflag, size = 0x8, scoped, tag = 'scoped memory for tpu_custom_call.1']
    %18 = vsyncpa [#allocation4], 0
    %s19 = scalar_lea.sflag [#allocation4], 1
    %20 = vsyncpa %s19, 0
    loop: start=0, step=1, limit=4
    $region2: #{tpu_custom_call.1} parent=1 // loop_pre_header
      _
    $region3: #{tpu_custom_call.1} parent=1 // loop_header
      %s22 = sphi 0, %s26
      %p23 = scmp.ge.s32.totalorder %s22, 4
      %s32 = sphi 0, %s34
      %s35 = sphi 0, %s32
      %s36 = sphi 0, %s35
      %s52 = sphi 0, %s36
      %s56 = sphi 0, %s56
      %s58 = sphi 0, %s56
      %s59 = sphi 0, %s58
      %s73 = sphi 0, %s59
      %s77 = sphi 0, %s77
      %s79 = sphi 0, %s77
      %s80 = sphi 0, %s79
      %s94 = sphi 0, %s80
      %s98 = sphi 0, %s98
      %s100 = sphi 0, %s98
      %s101 = sphi 0, %s100
      %s115 = sphi 0, %s101
      %s119 = sphi 0, %s119
      %s121 = sphi 0, %s119
      %s122 = sphi 0, %s121
      %s136 = sphi 0, %s122
      %s140 = sphi 0, %s140
      %s142 = sphi 0, %s140
      %s143 = sphi 0, %s142
      %s157 = sphi 0, %s143
      %s161 = sphi 0, %s161
      %s163 = sphi 0, %s161
      %s164 = sphi 0, %s163
      %s178 = sphi 0, %s164
      %s182 = sphi 0, %s182
      %s184 = sphi 0, %s182
      %s185 = sphi 0, %s184
      %s199 = sphi 0, %s185
      %s203 = sphi 0, %s203
      %s205 = sphi 0, %s203
      %s206 = sphi 0, %s205
      %s220 = sphi 0, %s206
      %s224 = sphi 0, %s224
      %s226 = sphi 0, %s224
      %s227 = sphi 0, %s226
      %s241 = sphi 0, %s227
      %s245 = sphi 0, %s245
      %s247 = sphi 0, %s245
      %s248 = sphi 0, %s247
      %s262 = sphi 0, %s248
      %s266 = sphi 0, %s266
      %s268 = sphi 0, %s266
      %s269 = sphi 0, %s268
      %s283 = sphi 0, %s269
      %s287 = sphi 0, %s287
      %s289 = sphi 0, %s287
      %s290 = sphi 0, %s289
      %s304 = sphi 0, %s290
      %s310 = sphi 0, %s312
      %s313 = sphi 0, %s310
      %s314 = sphi 0, %s313
      %s330 = sphi 0, %s314
    $region4: #{tpu_custom_call.1} parent=1 // loop_header_branch
      %25 = sbr.rel (%p23) target = $region8
    $region5: #{tpu_custom_call.1} parent=1 // loop_body
      %s27 = ssub.s32 %s22, 1
      %s28 = ssub.s32 %s22, 2
      %s29 = sadd.s32 %s22, 1
      %s30 = ssub.s32 %s22, %s29
      %p31 = scmp.eq.s32.totalorder %s30, 0
      %s33 = sadd.s32 %s32, 1
      %s34 = scalar_select %p31, %s32, %s33
      %p37 = pneg %p31
      %p38 = scmp.eq.s32.totalorder %s22, 1
      %p39 = por %p37, %p38
      %p40 = scmp.ne.s32.totalorder %s32, %s35
      %p41 = scmp.eq.s32.totalorder %s22, 0
      %p42 = por %p40, %p41
      %p43 = scmp.ne.s32.totalorder %s32, %s35
      %p44 = scmp.eq.s32.totalorder %s27, 1
      %p45 = por %p43, %p44
      %p46 = scmp.ne.s32.totalorder %s35, %s36
      %p47 = scmp.eq.s32.totalorder %s27, 0
      %p48 = por %p46, %p47
      %p49 = scmp.ne.s32.totalorder %s35, %s36
      %p50 = scmp.eq.s32.totalorder %s28, 1
      %p51 = por %p49, %p50
      %p53 = scmp.ne.s32.totalorder %s36, %s52
      %p54 = scmp.eq.s32.totalorder %s28, 0
      %p55 = por %p53, %p54
      %s57 = sadd.s32 %s56, 1
      %p60 = scmp.eq.s32.totalorder %s22, 1
      %p61 = scmp.ne.s32.totalorder %s56, %s58
      %p62 = scmp.eq.s32.totalorder %s22, 0
      %p63 = por %p61, %p62
      %p64 = scmp.ne.s32.totalorder %s56, %s58
      %p65 = scmp.eq.s32.totalorder %s27, 1
      %p66 = por %p64, %p65
      %p67 = scmp.ne.s32.totalorder %s58, %s59
      %p68 = scmp.eq.s32.totalorder %s27, 0
      %p69 = por %p67, %p68
      %p70 = scmp.ne.s32.totalorder %s58, %s59
      %p71 = scmp.eq.s32.totalorder %s28, 1
      %p72 = por %p70, %p71
      %p74 = scmp.ne.s32.totalorder %s59, %s73
      %p75 = scmp.eq.s32.totalorder %s28, 0
      %p76 = por %p74, %p75
      %s78 = sadd.s32 %s77, 1
      %p81 = scmp.eq.s32.totalorder %s22, 1
      %p82 = scmp.ne.s32.totalorder %s77, %s79
      %p83 = scmp.eq.s32.totalorder %s22, 0
      %p84 = por %p82, %p83
      %p85 = scmp.ne.s32.totalorder %s77, %s79
      %p86 = scmp.eq.s32.totalorder %s27, 1
      %p87 = por %p85, %p86
      %p88 = scmp.ne.s32.totalorder %s79, %s80
      %p89 = scmp.eq.s32.totalorder %s27, 0
      %p90 = por %p88, %p89
      %p91 = scmp.ne.s32.totalorder %s79, %s80
      %p92 = scmp.eq.s32.totalorder %s28, 1
      %p93 = por %p91, %p92
      %p95 = scmp.ne.s32.totalorder %s80, %s94
      %p96 = scmp.eq.s32.totalorder %s28, 0
      %p97 = por %p95, %p96
      %s99 = sadd.s32 %s98, 1
      %p102 = scmp.eq.s32.totalorder %s22, 1
      %p103 = scmp.ne.s32.totalorder %s98, %s100
      %p104 = scmp.eq.s32.totalorder %s22, 0
      %p105 = por %p103, %p104
      %p106 = scmp.ne.s32.totalorder %s98, %s100
      %p107 = scmp.eq.s32.totalorder %s27, 1
      %p108 = por %p106, %p107
      %p109 = scmp.ne.s32.totalorder %s100, %s101
      %p110 = scmp.eq.s32.totalorder %s27, 0
      %p111 = por %p109, %p110
      %p112 = scmp.ne.s32.totalorder %s100, %s101
      %p113 = scmp.eq.s32.totalorder %s28, 1
      %p114 = por %p112, %p113
      %p116 = scmp.ne.s32.totalorder %s101, %s115
      %p117 = scmp.eq.s32.totalorder %s28, 0
      %p118 = por %p116, %p117
      %s120 = sadd.s32 %s119, 1
      %p123 = scmp.eq.s32.totalorder %s22, 1
      %p124 = scmp.ne.s32.totalorder %s119, %s121
      %p125 = scmp.eq.s32.totalorder %s22, 0
      %p126 = por %p124, %p125
      %p127 = scmp.ne.s32.totalorder %s119, %s121
      %p128 = scmp.eq.s32.totalorder %s27, 1
      %p129 = por %p127, %p128
      %p130 = scmp.ne.s32.totalorder %s121, %s122
      %p131 = scmp.eq.s32.totalorder %s27, 0
      %p132 = por %p130, %p131
      %p133 = scmp.ne.s32.totalorder %s121, %s122
      %p134 = scmp.eq.s32.totalorder %s28, 1
      %p135 = por %p133, %p134
      %p137 = scmp.ne.s32.totalorder %s122, %s136
      %p138 = scmp.eq.s32.totalorder %s28, 0
      %p139 = por %p137, %p138
      %s141 = sadd.s32 %s140, 1
      %p144 = scmp.eq.s32.totalorder %s22, 1
      %p145 = scmp.ne.s32.totalorder %s140, %s142
      %p146 = scmp.eq.s32.totalorder %s22, 0
      %p147 = por %p145, %p146
      %p148 = scmp.ne.s32.totalorder %s140, %s142
      %p149 = scmp.eq.s32.totalorder %s27, 1
      %p150 = por %p148, %p149
      %p151 = scmp.ne.s32.totalorder %s142, %s143
      %p152 = scmp.eq.s32.totalorder %s27, 0
      %p153 = por %p151, %p152
      %p154 = scmp.ne.s32.totalorder %s142, %s143
      %p155 = scmp.eq.s32.totalorder %s28, 1
      %p156 = por %p154, %p155
      %p158 = scmp.ne.s32.totalorder %s143, %s157
      %p159 = scmp.eq.s32.totalorder %s28, 0
      %p160 = por %p158, %p159
      %s162 = sadd.s32 %s161, 1
      %p165 = scmp.eq.s32.totalorder %s22, 1
      %p166 = scmp.ne.s32.totalorder %s161, %s163
      %p167 = scmp.eq.s32.totalorder %s22, 0
      %p168 = por %p166, %p167
      %p169 = scmp.ne.s32.totalorder %s161, %s163
      %p170 = scmp.eq.s32.totalorder %s27, 1
      %p171 = por %p169, %p170
      %p172 = scmp.ne.s32.totalorder %s163, %s164
      %p173 = scmp.eq.s32.totalorder %s27, 0
      %p174 = por %p172, %p173
      %p175 = scmp.ne.s32.totalorder %s163, %s164
      %p176 = scmp.eq.s32.totalorder %s28, 1
      %p177 = por %p175, %p176
      %p179 = scmp.ne.s32.totalorder %s164, %s178
      %p180 = scmp.eq.s32.totalorder %s28, 0
      %p181 = por %p179, %p180
      %s183 = sadd.s32 %s182, 1
      %p186 = scmp.eq.s32.totalorder %s22, 1
      %p187 = scmp.ne.s32.totalorder %s182, %s184
      %p188 = scmp.eq.s32.totalorder %s22, 0
      %p189 = por %p187, %p188
      %p190 = scmp.ne.s32.totalorder %s182, %s184
      %p191 = scmp.eq.s32.totalorder %s27, 1
      %p192 = por %p190, %p191
      %p193 = scmp.ne.s32.totalorder %s184, %s185
      %p194 = scmp.eq.s32.totalorder %s27, 0
      %p195 = por %p193, %p194
      %p196 = scmp.ne.s32.totalorder %s184, %s185
      %p197 = scmp.eq.s32.totalorder %s28, 1
      %p198 = por %p196, %p197
      %p200 = scmp.ne.s32.totalorder %s185, %s199
      %p201 = scmp.eq.s32.totalorder %s28, 0
      %p202 = por %p200, %p201
      %s204 = sadd.s32 %s203, 1
      %p207 = scmp.eq.s32.totalorder %s22, 1
      %p208 = scmp.ne.s32.totalorder %s203, %s205
      %p209 = scmp.eq.s32.totalorder %s22, 0
      %p210 = por %p208, %p209
      %p211 = scmp.ne.s32.totalorder %s203, %s205
      %p212 = scmp.eq.s32.totalorder %s27, 1
      %p213 = por %p211, %p212
      %p214 = scmp.ne.s32.totalorder %s205, %s206
      %p215 = scmp.eq.s32.totalorder %s27, 0
      %p216 = por %p214, %p215
      %p217 = scmp.ne.s32.totalorder %s205, %s206
      %p218 = scmp.eq.s32.totalorder %s28, 1
      %p219 = por %p217, %p218
      %p221 = scmp.ne.s32.totalorder %s206, %s220
      %p222 = scmp.eq.s32.totalorder %s28, 0
      %p223 = por %p221, %p222
      %s225 = sadd.s32 %s224, 1
      %p228 = scmp.eq.s32.totalorder %s22, 1
      %p229 = scmp.ne.s32.totalorder %s224, %s226
      %p230 = scmp.eq.s32.totalorder %s22, 0
      %p231 = por %p229, %p230
      %p232 = scmp.ne.s32.totalorder %s224, %s226
      %p233 = scmp.eq.s32.totalorder %s27, 1
      %p234 = por %p232, %p233
      %p235 = scmp.ne.s32.totalorder %s226, %s227
      %p236 = scmp.eq.s32.totalorder %s27, 0
      %p237 = por %p235, %p236
      %p238 = scmp.ne.s32.totalorder %s226, %s227
      %p239 = scmp.eq.s32.totalorder %s28, 1
      %p240 = por %p238, %p239
      %p242 = scmp.ne.s32.totalorder %s227, %s241
      %p243 = scmp.eq.s32.totalorder %s28, 0
      %p244 = por %p242, %p243
      %s246 = sadd.s32 %s245, 1
      %p249 = scmp.eq.s32.totalorder %s22, 1
      %p250 = scmp.ne.s32.totalorder %s245, %s247
      %p251 = scmp.eq.s32.totalorder %s22, 0
      %p252 = por %p250, %p251
      %p253 = scmp.ne.s32.totalorder %s245, %s247
      %p254 = scmp.eq.s32.totalorder %s27, 1
      %p255 = por %p253, %p254
      %p256 = scmp.ne.s32.totalorder %s247, %s248
      %p257 = scmp.eq.s32.totalorder %s27, 0
      %p258 = por %p256, %p257
      %p259 = scmp.ne.s32.totalorder %s247, %s248
      %p260 = scmp.eq.s32.totalorder %s28, 1
      %p261 = por %p259, %p260
      %p263 = scmp.ne.s32.totalorder %s248, %s262
      %p264 = scmp.eq.s32.totalorder %s28, 0
      %p265 = por %p263, %p264
      %s267 = sadd.s32 %s266, 1
      %p270 = scmp.eq.s32.totalorder %s22, 1
      %p271 = scmp.ne.s32.totalorder %s266, %s268
      %p272 = scmp.eq.s32.totalorder %s22, 0
      %p273 = por %p271, %p272
      %p274 = scmp.ne.s32.totalorder %s266, %s268
      %p275 = scmp.eq.s32.totalorder %s27, 1
      %p276 = por %p274, %p275
      %p277 = scmp.ne.s32.totalorder %s268, %s269
      %p278 = scmp.eq.s32.totalorder %s27, 0
      %p279 = por %p277, %p278
      %p280 = scmp.ne.s32.totalorder %s268, %s269
      %p281 = scmp.eq.s32.totalorder %s28, 1
      %p282 = por %p280, %p281
      %p284 = scmp.ne.s32.totalorder %s269, %s283
      %p285 = scmp.eq.s32.totalorder %s28, 0
      %p286 = por %p284, %p285
      %s288 = sadd.s32 %s287, 1
      %p291 = scmp.eq.s32.totalorder %s22, 1
      %p292 = scmp.ne.s32.totalorder %s287, %s289
      %p293 = scmp.eq.s32.totalorder %s22, 0
      %p294 = por %p292, %p293
      %p295 = scmp.ne.s32.totalorder %s287, %s289
      %p296 = scmp.eq.s32.totalorder %s27, 1
      %p297 = por %p295, %p296
      %p298 = scmp.ne.s32.totalorder %s289, %s290
      %p299 = scmp.eq.s32.totalorder %s27, 0
      %p300 = por %p298, %p299
      %p301 = scmp.ne.s32.totalorder %s289, %s290
      %p302 = scmp.eq.s32.totalorder %s28, 1
      %p303 = por %p301, %p302
      %p305 = scmp.ne.s32.totalorder %s290, %s304
      %p306 = scmp.eq.s32.totalorder %s28, 0
      %p307 = por %p305, %p306
      %s308 = ssub.s32 %s22, %s29
      %p309 = scmp.eq.s32.totalorder %s308, 0
      %s311 = sadd.s32 %s310, 1
      %s312 = scalar_select %p309, %s310, %s311
      %p315 = pneg %p309
      %p316 = scmp.eq.s32.totalorder %s22, 1
      %p317 = por %p315, %p316
      %p318 = scmp.ne.s32.totalorder %s310, %s313
      %p319 = scmp.eq.s32.totalorder %s22, 0
      %p320 = por %p318, %p319
      %p321 = scmp.ne.s32.totalorder %s310, %s313
      %p322 = scmp.eq.s32.totalorder %s27, 1
      %p323 = por %p321, %p322
      %p324 = scmp.ne.s32.totalorder %s313, %s314
      %p325 = scmp.eq.s32.totalorder %s27, 0
      %p326 = por %p324, %p325
      %p327 = scmp.ne.s32.totalorder %s313, %s314
      %p328 = scmp.eq.s32.totalorder %s28, 1
      %p329 = por %p327, %p328
      %p331 = scmp.ne.s32.totalorder %s314, %s330
      %p332 = scmp.eq.s32.totalorder %s28, 0
      %p333 = por %p331, %p332
      %p334 = scmp.le.s32.totalorder 1, %s22
      %p335 = scmp.lt.s32.totalorder %s22, 3
      %p336 = pnand %p334, %p335
      %p337 = pneg %p336
      // Predicated region
      $region9: #{tpu_custom_call.1} parent=5 // pred_check
        _
      $region10: #{tpu_custom_call.1} parent=5 // pred_check_branch
        %339 = sbr.rel (%p336) target = $region12
      $region11: #{tpu_custom_call.1} parent=5 // pred_region
        %s340 = ssub.s32 %s22, 1
        // Predicated region
        $region13: #{tpu_custom_call.1} parent=11 // pred_check
          %p341 = pneg %p69
        $region14: #{tpu_custom_call.1} parent=11 // pred_check_branch
          %343 = sbr.rel (%p341) target = $region16
        $region15: #{tpu_custom_call.1} parent=11 // pred_region
          _
        $region16: #{tpu_custom_call.1} parent=11 // pred_fallthru
          _
        // Predicated region
        $region17: #{tpu_custom_call.1} parent=11 // pred_check
          %p344 = pneg %p90
        $region18: #{tpu_custom_call.1} parent=11 // pred_check_branch
          %346 = sbr.rel (%p344) target = $region20
        $region19: #{tpu_custom_call.1} parent=11 // pred_region
          _
        $region20: #{tpu_custom_call.1} parent=11 // pred_fallthru
          _
        // Predicated region
        $region21: #{tpu_custom_call.1} parent=11 // pred_check
          %p347 = pneg %p111
        $region22: #{tpu_custom_call.1} parent=11 // pred_check_branch
          %349 = sbr.rel (%p347) target = $region24
        $region23: #{tpu_custom_call.1} parent=11 // pred_region
          _
        $region24: #{tpu_custom_call.1} parent=11 // pred_fallthru
          _
        // Predicated region
        $region25: #{tpu_custom_call.1} parent=11 // pred_check
          %p350 = pneg %p132
        $region26: #{tpu_custom_call.1} parent=11 // pred_check_branch
          %352 = sbr.rel (%p350) target = $region28
        $region27: #{tpu_custom_call.1} parent=11 // pred_region
          _
        $region28: #{tpu_custom_call.1} parent=11 // pred_fallthru
          _
        // Predicated region
        $region29: #{tpu_custom_call.1} parent=11 // pred_check
          %p353 = pneg %p153
        $region30: #{tpu_custom_call.1} parent=11 // pred_check_branch
          %355 = sbr.rel (%p353) target = $region32
        $region31: #{tpu_custom_call.1} parent=11 // pred_region
          _
        $region32: #{tpu_custom_call.1} parent=11 // pred_fallthru
          _
        // Predicated region
        $region33: #{tpu_custom_call.1} parent=11 // pred_check
          %p356 = pneg %p174
        $region34: #{tpu_custom_call.1} parent=11 // pred_check_branch
          %358 = sbr.rel (%p356) target = $region36
        $region35: #{tpu_custom_call.1} parent=11 // pred_region
          _
        $region36: #{tpu_custom_call.1} parent=11 // pred_fallthru
          _
        // Predicated region
        $region37: #{tpu_custom_call.1} parent=11 // pred_check
          %p359 = pneg %p195
        $region38: #{tpu_custom_call.1} parent=11 // pred_check_branch
          %361 = sbr.rel (%p359) target = $region40
        $region39: #{tpu_custom_call.1} parent=11 // pred_region
          _
        $region40: #{tpu_custom_call.1} parent=11 // pred_fallthru
          _
        // Predicated region
        $region41: #{tpu_custom_call.1} parent=11 // pred_check
          %p362 = pneg %p216
        $region42: #{tpu_custom_call.1} parent=11 // pred_check_branch
          %364 = sbr.rel (%p362) target = $region44
        $region43: #{tpu_custom_call.1} parent=11 // pred_region
          _
        $region44: #{tpu_custom_call.1} parent=11 // pred_fallthru
          _
        // Predicated region
        $region45: #{tpu_custom_call.1} parent=11 // pred_check
          %p365 = pneg %p237
        $region46: #{tpu_custom_call.1} parent=11 // pred_check_branch
          %367 = sbr.rel (%p365) target = $region48
        $region47: #{tpu_custom_call.1} parent=11 // pred_region
          _
        $region48: #{tpu_custom_call.1} parent=11 // pred_fallthru
          _
        // Predicated region
        $region49: #{tpu_custom_call.1} parent=11 // pred_check
          %p368 = pneg %p258
        $region50: #{tpu_custom_call.1} parent=11 // pred_check_branch
          %370 = sbr.rel (%p368) target = $region52
        $region51: #{tpu_custom_call.1} parent=11 // pred_region
          _
        $region52: #{tpu_custom_call.1} parent=11 // pred_fallthru
          _
        // Predicated region
        $region53: #{tpu_custom_call.1} parent=11 // pred_check
          %p371 = pneg %p279
        $region54: #{tpu_custom_call.1} parent=11 // pred_check_branch
          %373 = sbr.rel (%p371) target = $region56
        $region55: #{tpu_custom_call.1} parent=11 // pred_region
          _
        $region56: #{tpu_custom_call.1} parent=11 // pred_fallthru
          _
        // Predicated region
        $region57: #{tpu_custom_call.1} parent=11 // pred_check
          %p374 = pneg %p300
        $region58: #{tpu_custom_call.1} parent=11 // pred_check_branch
          %376 = sbr.rel (%p374) target = $region60
        $region59: #{tpu_custom_call.1} parent=11 // pred_region
          _
        $region60: #{tpu_custom_call.1} parent=11 // pred_fallthru
          _
      $region12: #{tpu_custom_call.1} parent=5 // pred_fallthru
        _
      %p377 = scmp.lt.s32.totalorder %s22, 2
      // Predicated region
      $region61: #{tpu_custom_call.1} parent=5 // pred_check
        %p378 = pneg %p377
      $region62: #{tpu_custom_call.1} parent=5 // pred_check_branch
        %380 = sbr.rel (%p378) target = $region64
      $region63: #{tpu_custom_call.1} parent=5 // pred_region
        // Predicated region
        $region65: #{tpu_custom_call.1} parent=63 // pred_check
          %p381 = pneg %p42
        $region66: #{tpu_custom_call.1} parent=63 // pred_check_branch
          %383 = sbr.rel (%p381) target = $region68
        $region67: #{tpu_custom_call.1} parent=63 // pred_region
          %s384 = smul.u32 2, %s22
          %p385 = scmp.lt.s32.totalorder %s384, 3
          %s386 = scalar_select %p385, %s384, 3
          %s387 = smul.addr %s386, 8
          %s388 = scalar_lea.vmem %s0, %s387
          %s389 = smul.u32 2, %s22
        $region68: #{tpu_custom_call.1} parent=63 // pred_fallthru
          _
      $region64: #{tpu_custom_call.1} parent=5 // pred_fallthru
        _
      %p390 = scmp.le.s32.totalorder 1, %s22
      %p391 = scmp.lt.s32.totalorder %s22, 3
      %p392 = pnand %p390, %p391
      %p393 = pneg %p392
      // Predicated region
      $region69: #{tpu_custom_call.1} parent=5 // pred_check
        _
      $region70: #{tpu_custom_call.1} parent=5 // pred_check_branch
        %395 = sbr.rel (%p392) target = $region72
      $region71: #{tpu_custom_call.1} parent=5 // pred_region
        %s396 = ssub.s32 %s22, 1
        %s397 = smul.u32 2, %s27
        %p398 = scmp.lt.s32.totalorder %s397, 3
        %s399 = scalar_select %p398, %s397, 3
        %s400 = smul.addr %s399, 8
        %s401 = scalar_lea.vmem %s0, %s400
        %p402 = pneg %p48
        %p403 = pneg %p45
        %p404 = pneg %p69
        %p405 = pneg %p66
        %p406 = pneg %p90
        %p407 = pneg %p87
        %p408 = pneg %p111
        %p409 = pneg %p108
        %p410 = pneg %p132
        %p411 = pneg %p129
        %p412 = pneg %p153
        %p413 = pneg %p150
        %p414 = pneg %p174
        %p415 = pneg %p171
        %p416 = pneg %p195
        %p417 = pneg %p192
        %p418 = pneg %p216
        %p419 = pneg %p213
        %p420 = pneg %p237
        %p421 = pneg %p234
        %p422 = pneg %p258
        %p423 = pneg %p255
        %p424 = pneg %p279
        %p425 = pneg %p276
        %p426 = pneg %p300
        %p427 = pneg %p297
        %p428 = pneg %p326
        %p429 = pneg %p323
        %s430 = sand.u32 %s313, 1
        %s431 = scalar_lea.sflag [#allocation4], %s430
        %s432 = sand.u32 %s313, 1
        %s433 = smul.addr %s432, 16
        %s434 = scalar_lea.vmem [#allocation3], %s433
        %s435 = smul.u32 2, %s27
        %p436 = scmp.lt.s32.totalorder %s435, 3
        %s437 = scalar_select %p436, %s435, 3
        %s438 = smul.addr %s437, 8
        %s439 = scalar_lea.vmem %s0, %s438
        %s440 = smul.u32 2, %s27
        %s441 = smul.u32 2, %s27
        %v443 = vld [vmem:[%s1] sm:$0x1]
        %v444 = vld [vmem:[%s2] sm:$0x1]
        %v445 = vld [vmem:[%s3] sm:$0xf]
        %v446 = vld [vmem:[%s3 + $0x4] sm:$0xf]
        %v447 = vld [vmem:[%s4] sm:$0xff]
        %v448 = vld [vmem:[%s4 + $0x8] sm:$0xff]
        %v449 = vld [vmem:[%s5] sm:$0xf]
        %v450 = vld [vmem:[%s6] sm:$0xff]
        %v451 = vld [vmem:[%s439] sm:$0xff]
        %vm452 = vcmask 261120
        %v453 = vsel %vm452, %v451, 0.0
        %454 = vadd.xlane.f32.xlu0 %v453
        %v455 = vpop.xlane.xlu0 %454
        %v456 = vrcp.pop 32.0
        %v457 = vmul.f32 %v455, %v456
        %v458 = vsub.f32 %v451, %v457
        %v459 = vmul.f32 %v458, %v458
        %v460 = vsel %vm452, %v459, 0.0
        %461 = vadd.xlane.f32.xlu0 %v460
        %v462 = vpop.xlane.xlu0 %461
        %v463 = vmul.f32 %v462, %v456
        %v464 = vadd.f32 %v463, 1e-05
        %v465 = vrsqrt.pop %v464
        %v466 = vmul.f32 %v458, %v465
        %v468 = vlaneseq
        %v469 = vshrl.u32 %v468, 7
        %v470 = vsub.s32 0, %v469
        %v471 = vrot.slane %v443, %v470
        %v473 = vmul.f32 %v466, %v471
        %v475 = vlaneseq
        %v476 = vshrl.u32 %v475, 7
        %v477 = vsub.s32 0, %v476
        %v478 = vrot.slane %v444, %v477
        %v480 = vadd.f32 %v473, %v478
        %v481 = vpack.c.bf16 %v480, %v480
        %483 = vset.pattern.permute.xlu0 0
        %484 = vperm.xlu0 %483, %v447
        %v485 = vpop.permute.xlu0 %484
        %488 = vset.pattern.permute.xlu0 0
        %489 = vperm.xlu0 %488, %v448
        %v490 = vpop.permute.xlu0 %489
        %v494 = vunpack.c.l.b16 %v445
        %v495 = vunpack.c.l.b16 %v446
        %v496 = vpack.c.b16 %v495, %v494
        %vm497 = vcmask 64512
        %v499 = vsel %vm497, %v496, 0
        %vm501 = vcmask 1043456
        %v503 = vsel %vm501, %v481, 0
        %505 = vmatprep.subr.bf16.mxu0 0
        %506 = vmatpush1.bf16.msra.mxu0 %v503
        %507 = vmatprep.subr.bf16.mxu0 0
        %508 = vmatpush1.bf16.msra.mxu0 0
        %509 = vmatprep.subr.bf16.mxu0 0
        %510 = vmatpush1.bf16.msra.mxu0 0
        %511 = vmatprep.subr.bf16.mxu0 0
        %512 = vmatpush1.bf16.msra.mxu0 0
        %513 = vmatprep.subr.bf16.mxu0 0
        %514 = vmatpush1.bf16.msra.mxu0 0
        %515 = vmatprep.subr.bf16.mxu0 0
        %516 = vmatpush1.bf16.msra.mxu0 0
        %517 = vmatprep.subr.bf16.mxu0 0
        %518 = vmatpush1.bf16.msra.mxu0 0
        %519 = vmatprep.subr.bf16.mxu0 0
        %520 = vmatpush1.bf16.msra.mxu0 0
        %521 = vmatprep.subr.bf16.mxu0 0
        %522 = vmatpush1.bf16.msra.mxu0 0
        %523 = vmatprep.subr.bf16.mxu0 0
        %524 = vmatpush1.bf16.msra.mxu0 0
        %525 = vmatprep.subr.bf16.mxu0 0
        %526 = vmatpush1.bf16.msra.mxu0 0
        %527 = vmatprep.subr.bf16.mxu0 0
        %528 = vmatpush1.bf16.msra.mxu0 0
        %529 = vmatprep.subr.bf16.mxu0 0
        %530 = vmatpush1.bf16.msra.mxu0 0
        %531 = vmatprep.subr.bf16.mxu0 0
        %532 = vmatpush1.bf16.msra.mxu0 0
        %533 = vmatprep.subr.bf16.mxu0 0
        %534 = vmatpush1.bf16.msra.mxu0 0
        %535 = vmatprep.subr.bf16.mxu0 0
        %536 = vmatpush1.bf16.msra.mxu0 0
        %537 = vmatprep.mubr.bf16.mxu0 0
        %538 = vmatmul.mubr.bf16.gmra.mrb[0].mxu0 %v499
        %v539 = vpop.f32.mrb[0].mxu0
        %v540 = vadd.f32 %v485, %v539
        %v541 = vpop.f32.mrb[0].mxu0
        %v542 = vpop.f32.mrb[0].mxu0
        %v543 = vadd.f32 %v490, %v542
        %v544 = vpop.f32.mrb[0].mxu0
        %545 = vdwg.mxu0
        %v546 = vmul.f32 %v540, 0.5
        %v547 = vmul.f32 %v543, 0.5
        %v548 = vmul.f32 %v540, 0.70710677
        %v549 = vmul.f32 %v543, 0.70710677
        %v550 = verf.f32.pop %v548
        %v551 = verf.f32.pop %v549
        %v552 = vadd.f32 %v550, 1.0
        %v553 = vadd.f32 %v551, 1.0
        %v554 = vmul.f32 %v546, %v552
        %v555 = vmul.f32 %v547, %v553
        %v556 = vpack.c.bf16 %v555, %v554
        %vm557 = vcmask 130048
        %v559 = vsel %vm557, %v449, 0
        %561 = vmatprep.subr.bf16.mxu0 0
        %562 = vmatpush1.bf16.msra.mxu0 %v556
        %563 = vmatprep.subr.bf16.mxu0 0
        %564 = vmatpush1.bf16.msra.mxu0 0
        %565 = vmatprep.subr.bf16.mxu0 0
        %566 = vmatpush1.bf16.msra.mxu0 0
        %567 = vmatprep.subr.bf16.mxu0 0
        %568 = vmatpush1.bf16.msra.mxu0 0
        %569 = vmatprep.subr.bf16.mxu0 0
        %570 = vmatpush1.bf16.msra.mxu0 0
        %571 = vmatprep.subr.bf16.mxu0 0
        %572 = vmatpush1.bf16.msra.mxu0 0
        %573 = vmatprep.subr.bf16.mxu0 0
        %574 = vmatpush1.bf16.msra.mxu0 0
        %575 = vmatprep.subr.bf16.mxu0 0
        %576 = vmatpush1.bf16.msra.mxu0 0
        %577 = vmatprep.subr.bf16.mxu0 0
        %578 = vmatpush1.bf16.msra.mxu0 0
        %579 = vmatprep.subr.bf16.mxu0 0
        %580 = vmatpush1.bf16.msra.mxu0 0
        %581 = vmatprep.subr.bf16.mxu0 0
        %582 = vmatpush1.bf16.msra.mxu0 0
        %583 = vmatprep.subr.bf16.mxu0 0
        %584 = vmatpush1.bf16.msra.mxu0 0
        %585 = vmatprep.subr.bf16.mxu0 0
        %586 = vmatpush1.bf16.msra.mxu0 0
        %587 = vmatprep.subr.bf16.mxu0 0
        %588 = vmatpush1.bf16.msra.mxu0 0
        %589 = vmatprep.subr.bf16.mxu0 0
        %590 = vmatpush1.bf16.msra.mxu0 0
        %591 = vmatprep.subr.bf16.mxu0 0
        %592 = vmatpush1.bf16.msra.mxu0 0
        %593 = vmatprep.mubr.bf16.mxu0 0
        %594 = vmatmul.mubr.bf16.gmra.mrb[0].mxu0 %v559
        %v595 = vpop.f32.mrb[0].mxu0
        %v596 = vadd.f32 0.0, %v595
        %v597 = vpop.f32.mrb[0].mxu0
        %v598 = vpop.f32.mrb[0].mxu0
        %v599 = vpop.f32.mrb[0].mxu0
        %600 = vdwg.mxu0
        %v601 = vadd.f32 %v451, %v596
        %603 = vset.pattern.permute.xlu0 0
        %604 = vperm.xlu0 %603, %v450
        %v605 = vpop.permute.xlu0 %604
        %v607 = vadd.f32 %v601, %v605
        %608 = vst.msk [vmem:[#allocation2] sm:$0xff] %vm452, %v607
        %s609 = scalar_lea.vmem %s439, 8
        %v610 = vld [vmem:[%s609] sm:$0xff]
        %v611 = vsel %vm452, %v610, 0.0
        %612 = vadd.xlane.f32.xlu0 %v611
        %v613 = vpop.xlane.xlu0 %612
        %v614 = vmul.f32 %v613, %v456
        %v615 = vsub.f32 %v610, %v614
        %v616 = vmul.f32 %v615, %v615
        %v617 = vsel %vm452, %v616, 0.0
        %618 = vadd.xlane.f32.xlu0 %v617
        %v619 = vpop.xlane.xlu0 %618
        %v620 = vmul.f32 %v619, %v456
        %v621 = vadd.f32 %v620, 1e-05
        %v622 = vrsqrt.pop %v621
        %v623 = vmul.f32 %v615, %v622
        %v624 = vmul.f32 %v623, %v471
        %v625 = vadd.f32 %v624, %v478
        %v626 = vpack.c.bf16 %v625, %v625
        %v628 = vsel %vm501, %v626, 0
        %630 = vmatprep.subr.bf16.mxu0 0
        %631 = vmatpush1.bf16.msra.mxu0 %v628
        %632 = vmatprep.subr.bf16.mxu0 0
        %633 = vmatpush1.bf16.msra.mxu0 0
        %634 = vmatprep.subr.bf16.mxu0 0
        %635 = vmatpush1.bf16.msra.mxu0 0
        %636 = vmatprep.subr.bf16.mxu0 0
        %637 = vmatpush1.bf16.msra.mxu0 0
        %638 = vmatprep.subr.bf16.mxu0 0
        %639 = vmatpush1.bf16.msra.mxu0 0
        %640 = vmatprep.subr.bf16.mxu0 0
        %641 = vmatpush1.bf16.msra.mxu0 0
        %642 = vmatprep.subr.bf16.mxu0 0
        %643 = vmatpush1.bf16.msra.mxu0 0
        %644 = vmatprep.subr.bf16.mxu0 0
        %645 = vmatpush1.bf16.msra.mxu0 0
        %646 = vmatprep.subr.bf16.mxu0 0
        %647 = vmatpush1.bf16.msra.mxu0 0
        %648 = vmatprep.subr.bf16.mxu0 0
        %649 = vmatpush1.bf16.msra.mxu0 0
        %650 = vmatprep.subr.bf16.mxu0 0
        %651 = vmatpush1.bf16.msra.mxu0 0
        %652 = vmatprep.subr.bf16.mxu0 0
        %653 = vmatpush1.bf16.msra.mxu0 0
        %654 = vmatprep.subr.bf16.mxu0 0
        %655 = vmatpush1.bf16.msra.mxu0 0
        %656 = vmatprep.subr.bf16.mxu0 0
        %657 = vmatpush1.bf16.msra.mxu0 0
        %658 = vmatprep.subr.bf16.mxu0 0
        %659 = vmatpush1.bf16.msra.mxu0 0
        %660 = vmatprep.subr.bf16.mxu0 0
        %661 = vmatpush1.bf16.msra.mxu0 0
        %662 = vmatprep.mubr.bf16.mxu0 0
        %663 = vmatmul.mubr.bf16.gmra.mrb[0].mxu0 %v499
        %v664 = vpop.f32.mrb[0].mxu0
        %v665 = vadd.f32 %v485, %v664
        %v666 = vpop.f32.mrb[0].mxu0
        %v667 = vpop.f32.mrb[0].mxu0
        %v668 = vadd.f32 %v490, %v667
        %v669 = vpop.f32.mrb[0].mxu0
        %670 = vdwg.mxu0
        %v671 = vmul.f32 %v665, 0.5
        %v672 = vmul.f32 %v668, 0.5
        %v673 = vmul.f32 %v665, 0.70710677
        %v674 = vmul.f32 %v668, 0.70710677
        %v675 = verf.f32.pop %v673
        %v676 = verf.f32.pop %v674
        %v677 = vadd.f32 %v675, 1.0
        %v678 = vadd.f32 %v676, 1.0
        %v679 = vmul.f32 %v671, %v677
        %v680 = vmul.f32 %v672, %v678
        %v681 = vpack.c.bf16 %v680, %v679
        %682 = vmatprep.subr.bf16.mxu0 0
        %683 = vmatpush1.bf16.msra.mxu0 %v681
        %684 = vmatprep.subr.bf16.mxu0 0
        %685 = vmatpush1.bf16.msra.mxu0 0
        %686 = vmatprep.subr.bf16.mxu0 0
        %687 = vmatpush1.bf16.msra.mxu0 0
        %688 = vmatprep.subr.bf16.mxu0 0
        %689 = vmatpush1.bf16.msra.mxu0 0
        %690 = vmatprep.subr.bf16.mxu0 0
        %691 = vmatpush1.bf16.msra.mxu0 0
        %692 = vmatprep.subr.bf16.mxu0 0
        %693 = vmatpush1.bf16.msra.mxu0 0
        %694 = vmatprep.subr.bf16.mxu0 0
        %695 = vmatpush1.bf16.msra.mxu0 0
        %696 = vmatprep.subr.bf16.mxu0 0
        %697 = vmatpush1.bf16.msra.mxu0 0
        %698 = vmatprep.subr.bf16.mxu0 0
        %699 = vmatpush1.bf16.msra.mxu0 0
        %700 = vmatprep.subr.bf16.mxu0 0
        %701 = vmatpush1.bf16.msra.mxu0 0
        %702 = vmatprep.subr.bf16.mxu0 0
        %703 = vmatpush1.bf16.msra.mxu0 0
        %704 = vmatprep.subr.bf16.mxu0 0
        %705 = vmatpush1.bf16.msra.mxu0 0
        %706 = vmatprep.subr.bf16.mxu0 0
        %707 = vmatpush1.bf16.msra.mxu0 0
        %708 = vmatprep.subr.bf16.mxu0 0
        %709 = vmatpush1.bf16.msra.mxu0 0
        %710 = vmatprep.subr.bf16.mxu0 0
        %711 = vmatpush1.bf16.msra.mxu0 0
        %712 = vmatprep.subr.bf16.mxu0 0
        %713 = vmatpush1.bf16.msra.mxu0 0
        %714 = vmatprep.mubr.bf16.mxu0 0
        %715 = vmatmul.mubr.bf16.gmra.mrb[0].mxu0 %v559
        %v716 = vpop.f32.mrb[0].mxu0
        %v717 = vadd.f32 0.0, %v716
        %v718 = vpop.f32.mrb[0].mxu0
        %v719 = vpop.f32.mrb[0].mxu0
        %v720 = vpop.f32.mrb[0].mxu0
        %721 = vdwg.mxu0
        %v722 = vadd.f32 %v610, %v717
        %v723 = vadd.f32 %v722, %v605
        %s724 = scalar_lea.vmem [#allocation2], 8
        %725 = vst.msk [vmem:[%s724] sm:$0xff] %vm452, %v723
        %v726 = vld [vmem:[#allocation2] sm:$0xff]
        %v727 = vld [vmem:[#allocation2 + $0x8] sm:$0xff]
        %v728 = vld [vmem:[%s7] sm:$0x1]
        %v729 = vld [vmem:[%s8] sm:$0x1]
        %v730 = vsel %vm452, %v726, 0.0
        %731 = vadd.xlane.f32.xlu0 %v730
        %v732 = vpop.xlane.xlu0 %731
        %v733 = vsel %vm452, %v727, 0.0
        %734 = vadd.xlane.f32.xlu0 %v733
        %v735 = vpop.xlane.xlu0 %734
        %v736 = vmul.f32 %v732, %v456
        %v737 = vmul.f32 %v735, %v456
        %v738 = vsub.f32 %v726, %v736
        %v739 = vsub.f32 %v727, %v737
        %v740 = vmul.f32 %v738, %v738
        %v741 = vmul.f32 %v739, %v739
        %v742 = vsel %vm452, %v740, 0.0
        %743 = vadd.xlane.f32.xlu0 %v742
        %v744 = vpop.xlane.xlu0 %743
        %v745 = vsel %vm452, %v741, 0.0
        %746 = vadd.xlane.f32.xlu0 %v745
        %v747 = vpop.xlane.xlu0 %746
        %v748 = vmul.f32 %v744, %v456
        %v749 = vmul.f32 %v747, %v456
        %v750 = vadd.f32 %v748, 1e-05
        %v751 = vadd.f32 %v749, 1e-05
        %v752 = vrsqrt.pop %v750
        %v753 = vrsqrt.pop %v751
        %v754 = vmul.f32 %v738, %v752
        %v755 = vmul.f32 %v739, %v753
        %v757 = vlaneseq
        %v758 = vshrl.u32 %v757, 7
        %v759 = vsub.s32 0, %v758
        %v760 = vrot.slane %v728, %v759
        %v762 = vmul.f32 %v754, %v760
        %v763 = vmul.f32 %v755, %v760
        %v765 = vlaneseq
        %v766 = vshrl.u32 %v765, 7
        %v767 = vsub.s32 0, %v766
        %v768 = vrot.slane %v729, %v767
        %v770 = vadd.f32 %v762, %v768
        %v771 = vadd.f32 %v763, %v768
        %v772 = vpack.c.bf16 %v771, %v770
        %v773 = vld [vmem:[%s9] sm:$0xf]
        %v774 = vld [vmem:[%s9 + $0x4] sm:$0xf]
        %v775 = vld [vmem:[%s9 + $0x8] sm:$0xf]
        %v776 = vld [vmem:[%s9 + $0xc] sm:$0xf]
        %v777 = vld [vmem:[%s10] sm:$0x1]
        %v779 = vlaneseq
        %v780 = vshrl.u32 %v779, 7
        %v781 = vsub.s32 0, %v780
        %v782 = vrot.slane %v777, %v781
        %v788 = vunpack.c.l.b16 %v773
        %v789 = vunpack.c.l.b16 %v774
        %v790 = vunpack.c.l.b16 %v775
        %v791 = vunpack.c.l.b16 %v776
        %v792 = vpack.c.b16 %v789, %v788
        %v793 = vpack.c.b16 %v791, %v790
        %v797 = vsel %vm452, %v772, 0
        %799 = vmatprep.subr.bf16.mxu0 0
        %800 = vmatpush1.bf16.msra.mxu0 %v792
        %801 = vmatprep.subr.bf16.mxu0 0
        %802 = vmatpush1.bf16.msra.mxu0 %v793
        %803 = vmatprep.subr.bf16.mxu0 0
        %804 = vmatpush1.bf16.msra.mxu0 0
        %805 = vmatprep.subr.bf16.mxu0 0
        %806 = vmatpush1.bf16.msra.mxu0 0
        %807 = vmatprep.subr.bf16.mxu0 0
        %808 = vmatpush1.bf16.msra.mxu0 0
        %809 = vmatprep.subr.bf16.mxu0 0
        %810 = vmatpush1.bf16.msra.mxu0 0
        %811 = vmatprep.subr.bf16.mxu0 0
        %812 = vmatpush1.bf16.msra.mxu0 0
        %813 = vmatprep.subr.bf16.mxu0 0
        %814 = vmatpush1.bf16.msra.mxu0 0
        %815 = vmatprep.subr.bf16.mxu0 0
        %816 = vmatpush1.bf16.msra.mxu0 0
        %817 = vmatprep.subr.bf16.mxu0 0
        %818 = vmatpush1.bf16.msra.mxu0 0
        %819 = vmatprep.subr.bf16.mxu0 0
        %820 = vmatpush1.bf16.msra.mxu0 0
        %821 = vmatprep.subr.bf16.mxu0 0
        %822 = vmatpush1.bf16.msra.mxu0 0
        %823 = vmatprep.subr.bf16.mxu0 0
        %824 = vmatpush1.bf16.msra.mxu0 0
        %825 = vmatprep.subr.bf16.mxu0 0
        %826 = vmatpush1.bf16.msra.mxu0 0
        %827 = vmatprep.subr.bf16.mxu0 0
        %828 = vmatpush1.bf16.msra.mxu0 0
        %829 = vmatprep.subr.bf16.mxu0 0
        %830 = vmatpush1.bf16.msra.mxu0 0
        %831 = vmatprep.mubr.bf16.mxu0 0
        %832 = vmatmul.mubr.bf16.gmra.mrb[0].mxu0 %v797
        %v833 = vpop.f32.mrb[0].mxu0
        %v834 = vadd.f32 %v782, %v833
        %v835 = vpop.f32.mrb[0].mxu0
        %v836 = vpop.f32.mrb[0].mxu0
        %v837 = vadd.f32 %v782, %v836
        %v838 = vpop.f32.mrb[0].mxu0
        %839 = vdwg.mxu0
        %v840 = vmul.f32 %v834, 0.5
        %v841 = vmul.f32 %v837, 0.5
        %v842 = vmul.f32 %v834, 0.70710677
        %v843 = vmul.f32 %v837, 0.70710677
        %v844 = verf.f32.pop %v842
        %v845 = verf.f32.pop %v843
        %v846 = vadd.f32 %v844, 1.0
        %v847 = vadd.f32 %v845, 1.0
        %v848 = vmul.f32 %v840, %v846
        %v849 = vmul.f32 %v841, %v847
        %v850 = vpack.c.bf16 %v849, %v848
        %v851 = vld [vmem:[%s11] sm:$0xf]
        %v852 = vld [vmem:[%s11 + $0x4] sm:$0xf]
        %v853 = vld [vmem:[%s11 + $0x8] sm:$0xf]
        %v854 = vld [vmem:[%s11 + $0xc] sm:$0xf]
        %v855 = vld [vmem:[%s11 + $0x10] sm:$0xf]
        %v856 = vld [vmem:[%s11 + $0x14] sm:$0xf]
        %v857 = vld [vmem:[%s11 + $0x18] sm:$0xf]
        %v858 = vld [vmem:[%s11 + $0x1c] sm:$0xf]
        %v859 = vld [vmem:[%s12] sm:$0x1]
        %v861 = vlaneseq
        %v862 = vshrl.u32 %v861, 7
        %v863 = vsub.s32 0, %v862
        %v864 = vrot.slane %v859, %v863
        %v874 = vunpack.c.l.b16 %v851
        %v875 = vunpack.c.l.b16 %v852
        %v876 = vunpack.c.l.b16 %v853
        %v877 = vunpack.c.l.b16 %v854
        %v878 = vunpack.c.l.b16 %v855
        %v879 = vunpack.c.l.b16 %v856
        %v880 = vunpack.c.l.b16 %v857
        %v881 = vunpack.c.l.b16 %v858
        %v882 = vpack.c.b16 %v875, %v874
        %v883 = vpack.c.b16 %v877, %v876
        %v884 = vpack.c.b16 %v879, %v878
        %v885 = vpack.c.b16 %v881, %v880
        %vm890 = vcmask 523264
        %v892 = vsel %vm890, %v850, 0
        %894 = vmatprep.subr.bf16.mxu0 0
        %895 = vmatpush1.bf16.msra.mxu0 %v882
        %896 = vmatprep.subr.bf16.mxu0 0
        %897 = vmatpush1.bf16.msra.mxu0 %v883
        %898 = vmatprep.subr.bf16.mxu0 0
        %899 = vmatpush1.bf16.msra.mxu0 %v884
        %900 = vmatprep.subr.bf16.mxu0 0
        %901 = vmatpush1.bf16.msra.mxu0 %v885
        %902 = vmatprep.subr.bf16.mxu0 0
        %903 = vmatpush1.bf16.msra.mxu0 0
        %904 = vmatprep.subr.bf16.mxu0 0
        %905 = vmatpush1.bf16.msra.mxu0 0
        %906 = vmatprep.subr.bf16.mxu0 0
        %907 = vmatpush1.bf16.msra.mxu0 0
        %908 = vmatprep.subr.bf16.mxu0 0
        %909 = vmatpush1.bf16.msra.mxu0 0
        %910 = vmatprep.subr.bf16.mxu0 0
        %911 = vmatpush1.bf16.msra.mxu0 0
        %912 = vmatprep.subr.bf16.mxu0 0
        %913 = vmatpush1.bf16.msra.mxu0 0
        %914 = vmatprep.subr.bf16.mxu0 0
        %915 = vmatpush1.bf16.msra.mxu0 0
        %916 = vmatprep.subr.bf16.mxu0 0
        %917 = vmatpush1.bf16.msra.mxu0 0
        %918 = vmatprep.subr.bf16.mxu0 0
        %919 = vmatpush1.bf16.msra.mxu0 0
        %920 = vmatprep.subr.bf16.mxu0 0
        %921 = vmatpush1.bf16.msra.mxu0 0
        %922 = vmatprep.subr.bf16.mxu0 0
        %923 = vmatpush1.bf16.msra.mxu0 0
        %924 = vmatprep.subr.bf16.mxu0 0
        %925 = vmatpush1.bf16.msra.mxu0 0
        %926 = vmatprep.mubr.bf16.mxu0 0
        %927 = vmatmul.mubr.bf16.gmra.mrb[0].mxu0 %v892
        %v928 = vpop.f32.mrb[0].mxu0
        %v929 = vadd.f32 %v864, %v928
        %v930 = vpop.f32.mrb[0].mxu0
        %v931 = vpop.f32.mrb[0].mxu0
        %v932 = vadd.f32 %v864, %v931
        %v933 = vpop.f32.mrb[0].mxu0
        %934 = vdwg.mxu0
        %v935 = vadd.f32 %v726, %v929
        %v936 = vadd.f32 %v727, %v932
        %937 = vst.msk [vmem:[%s434] sm:$0xff] %vm452, %v935
        %938 = vst.msk [vmem:[%s434 + $0x8] sm:$0xff] %vm452, %v936
        %s939 = sand.u32 %s313, 1
        %s940 = scalar_lea.sflag [#allocation4], %s939
        %s941 = sand.u32 %s313, 1
        %s942 = smul.addr %s941, 16
        %s943 = scalar_lea.vmem [#allocation3], %s942
        // Predicated region
        $region73: #{tpu_custom_call.1} parent=71 // pred_check
          %p944 = pneg %p323
        $region74: #{tpu_custom_call.1} parent=71 // pred_check_branch
          %946 = sbr.rel (%p944) target = $region76
        $region75: #{tpu_custom_call.1} parent=71 // pred_region
          %s947 = smul.u32 2, %s27
          %s949 = ssub.s32 256, 256
          %950 = vsyncadd %s940, %s949
          %s951 = smul.addr %s947, 128
          %s952 = scalar_lea.hbm %s13, %s951
          %s953 = sshll.u32 %s943, 4
          %s954 = int_to_ptr.vmem [resolvable:$true] %s953
          %959 = dma.vmem_to_hbm [thread:$0]  %s954, 256, %s952, %s940, 128, 128, 8
        $region76: #{tpu_custom_call.1} parent=71 // pred_fallthru
          _
      $region72: #{tpu_custom_call.1} parent=5 // pred_fallthru
        _
      %p960 = scmp.le.s32.totalorder 2, %s22
      // Predicated region
      $region77: #{tpu_custom_call.1} parent=5 // pred_check
        %p961 = pneg %p960
      $region78: #{tpu_custom_call.1} parent=5 // pred_check_branch
        %963 = sbr.rel (%p961) target = $region80
      $region79: #{tpu_custom_call.1} parent=5 // pred_region
        %s964 = ssub.s32 %s22, 2
        // Predicated region
        $region81: #{tpu_custom_call.1} parent=79 // pred_check
          %p965 = pneg %p329
        $region82: #{tpu_custom_call.1} parent=79 // pred_check_branch
          %967 = sbr.rel (%p965) target = $region84
        $region83: #{tpu_custom_call.1} parent=79 // pred_region
          %s968 = sand.u32 %s314, 1
          %s969 = scalar_lea.sflag [#allocation4], %s968
          %s970 = sand.u32 %s314, 1
          %s971 = smul.addr %s970, 16
          %s972 = scalar_lea.vmem [#allocation3], %s971
          %973 = dma.done %s969, 256
        $region84: #{tpu_custom_call.1} parent=79 // pred_fallthru
          _
      $region80: #{tpu_custom_call.1} parent=5 // pred_fallthru
        _
    $region6: #{tpu_custom_call.1} parent=1 // loop_footer
      %s26 = sadd.s32 1, %s22
    $region7: #{tpu_custom_call.1} parent=1 // loop_footer_branch
      %21 = sbr.rel target = $region3
    $region8: #{tpu_custom_call.1} parent=1 // loop_exit
      _
    %974 = vsyncpa [#allocation4], 1
    %s975 = scalar_lea.sflag [#allocation4], 1
    %976 = vsyncpa %s975, 1

// kernel: tpu_custom_call.1
$region0: #{tpu_custom_call.1}
  #allocation0 [shape = 'u32[]', space=smem, size = 0x4, offset = 0x4, fixed_abs, tag = 'smem constant byte address 0x4 - core index']
  #allocation1 [shape = 'u32[144,128]{1,0:T(1,128)}', space=vmem, size = 0x12000, scoped, tag = 'internal scratch']
  #allocation2 [shape = 'f32[2,8,32]{2,1,0:T(8,128)}', space=vmem, size = 0x2000, scoped, tag = 'scratch operand']
  %s0 = inlined_call_operand.vmem [shape: f32[4,8,32], index: 0, kind: input, shape index: {}]
  %s1 = inlined_call_operand.vmem [shape: f32[1,32], index: 1, kind: input, shape index: {}]
  %s2 = inlined_call_operand.vmem [shape: f32[1,32], index: 2, kind: input, shape index: {}]
  %s3 = inlined_call_operand.vmem [shape: bf16[16,8], index: 3, kind: input, shape index: {}]
  %s4 = inlined_call_operand.vmem [shape: f32[16,1], index: 4, kind: input, shape index: {}]
  %s5 = inlined_call_operand.vmem [shape: bf16[8,16], index: 5, kind: input, shape index: {}]
  %s6 = inlined_call_operand.vmem [shape: f32[8,1], index: 6, kind: input, shape index: {}]
  %s7 = inlined_call_operand.vmem [shape: f32[1,32], index: 7, kind: input, shape index: {}]
  %s8 = inlined_call_operand.vmem [shape: f32[1,32], index: 8, kind: input, shape index: {}]
  %s9 = inlined_call_operand.vmem [shape: bf16[32,64], index: 9, kind: input, shape index: {}]
  %s10 = inlined_call_operand.vmem [shape: f32[1,64], index: 10, kind: input, shape index: {}]
  %s11 = inlined_call_operand.vmem [shape: bf16[64,32], index: 11, kind: input, shape index: {}]
  %s12 = inlined_call_operand.vmem [shape: f32[1,32], index: 12, kind: input, shape index: {}]
  %s13 = inlined_call_operand.hbm [shape: f32[4,8,32], index: 13, kind: output, shape index: {}]
  %s14 = sld [smem:[#allocation0]]
  $region85: #{tpu_custom_call.1} parent=0
    _
  %s16 = ssub.s32 1, %s14
  %s17 = scalar_select 0, %s16, %s14
  $region1: #{tpu_custom_call.1} parent=0
    #allocation3 [shape = 'u8[16384]{0}', space=vmem, size = 0x4000, scoped, tag = 'output window, operand 0']
    #allocation4 [shape = 's32[2]{0}', space=sflag, size = 0x8, scoped, tag = 'scoped memory for tpu_custom_call.1']
    %18 = vsyncpa [#allocation4], 0
    %s19 = scalar_lea.sflag [#allocation4], 1
    %20 = vsyncpa %s19, 0
    loop: start=0, step=1, limit=4
    $region2: #{tpu_custom_call.1} parent=1 // loop_pre_header
      _
    $region3: #{tpu_custom_call.1} parent=1 // loop_header
      %s22 = sphi 0, %s26
      %p23 = scmp.ge.s32.totalorder %s22, 4
      %s32 = sphi 0, %s34
      %s35 = sphi 0, %s32
      %s36 = sphi 0, %s35
      %s52 = sphi 0, %s36
      %s56 = sphi 0, %s56
      %s58 = sphi 0, %s56
      %s59 = sphi 0, %s58
      %s73 = sphi 0, %s59
      %s77 = sphi 0, %s77
      %s79 = sphi 0, %s77
      %s80 = sphi 0, %s79
      %s94 = sphi 0, %s80
      %s98 = sphi 0, %s98
      %s100 = sphi 0, %s98
      %s101 = sphi 0, %s100
      %s115 = sphi 0, %s101
      %s119 = sphi 0, %s119
      %s121 = sphi 0, %s119
      %s122 = sphi 0, %s121
      %s136 = sphi 0, %s122
      %s140 = sphi 0, %s140
      %s142 = sphi 0, %s140
      %s143 = sphi 0, %s142
      %s157 = sphi 0, %s143
      %s161 = sphi 0, %s161
      %s163 = sphi 0, %s161
      %s164 = sphi 0, %s163
      %s178 = sphi 0, %s164
      %s182 = sphi 0, %s182
      %s184 = sphi 0, %s182
      %s185 = sphi 0, %s184
      %s199 = sphi 0, %s185
      %s203 = sphi 0, %s203
      %s205 = sphi 0, %s203
      %s206 = sphi 0, %s205
      %s220 = sphi 0, %s206
      %s224 = sphi 0, %s224
      %s226 = sphi 0, %s224
      %s227 = sphi 0, %s226
      %s241 = sphi 0, %s227
      %s245 = sphi 0, %s245
      %s247 = sphi 0, %s245
      %s248 = sphi 0, %s247
      %s262 = sphi 0, %s248
      %s266 = sphi 0, %s266
      %s268 = sphi 0, %s266
      %s269 = sphi 0, %s268
      %s283 = sphi 0, %s269
      %s287 = sphi 0, %s287
      %s289 = sphi 0, %s287
      %s290 = sphi 0, %s289
      %s304 = sphi 0, %s290
      %s310 = sphi 0, %s312
      %s313 = sphi 0, %s310
      %s314 = sphi 0, %s313
      %s330 = sphi 0, %s314
    $region4: #{tpu_custom_call.1} parent=1 // loop_header_branch
      %25 = sbr.rel (%p23) target = $region8
    $region5: #{tpu_custom_call.1} parent=1 // loop_body
      %s27 = ssub.s32 %s22, 1
      %s28 = ssub.s32 %s22, 2
      %s29 = sadd.s32 %s22, 1
      %s30 = ssub.s32 %s22, %s29
      %p31 = scmp.eq.s32.totalorder %s30, 0
      %s33 = sadd.s32 %s32, 1
      %s34 = scalar_select %p31, %s32, %s33
      %p37 = pneg %p31
      %p38 = scmp.eq.s32.totalorder %s22, 1
      %p39 = por %p37, %p38
      %p40 = scmp.ne.s32.totalorder %s32, %s35
      %p41 = scmp.eq.s32.totalorder %s22, 0
      %p42 = por %p40, %p41
      %p43 = scmp.ne.s32.totalorder %s32, %s35
      %p44 = scmp.eq.s32.totalorder %s27, 1
      %p45 = por %p43, %p44
      %p46 = scmp.ne.s32.totalorder %s35, %s36
      %p47 = scmp.eq.s32.totalorder %s27, 0
      %p48 = por %p46, %p47
      %p49 = scmp.ne.s32.totalorder %s35, %s36
      %p50 = scmp.eq.s32.totalorder %s28, 1
      %p51 = por %p49, %p50
      %p53 = scmp.ne.s32.totalorder %s36, %s52
      %p54 = scmp.eq.s32.totalorder %s28, 0
      %p55 = por %p53, %p54
      %s57 = sadd.s32 %s56, 1
      %p60 = scmp.eq.s32.totalorder %s22, 1
      %p61 = scmp.ne.s32.totalorder %s56, %s58
      %p62 = scmp.eq.s32.totalorder %s22, 0
      %p63 = por %p61, %p62
      %p64 = scmp.ne.s32.totalorder %s56, %s58
      %p65 = scmp.eq.s32.totalorder %s27, 1
      %p66 = por %p64, %p65
      %p67 = scmp.ne.s32.totalorder %s58, %s59
      %p68 = scmp.eq.s32.totalorder %s27, 0
      %p69 = por %p67, %p68
      %p70 = scmp.ne.s32.totalorder %s58, %s59
      %p71 = scmp.eq.s32.totalorder %s28, 1
      %p72 = por %p70, %p71
      %p74 = scmp.ne.s32.totalorder %s59, %s73
      %p75 = scmp.eq.s32.totalorder %s28, 0
      %p76 = por %p74, %p75
      %s78 = sadd.s32 %s77, 1
      %p81 = scmp.eq.s32.totalorder %s22, 1
      %p82 = scmp.ne.s32.totalorder %s77, %s79
      %p83 = scmp.eq.s32.totalorder %s22, 0
      %p84 = por %p82, %p83
      %p85 = scmp.ne.s32.totalorder %s77, %s79
      %p86 = scmp.eq.s32.totalorder %s27, 1
      %p87 = por %p85, %p86
      %p88 = scmp.ne.s32.totalorder %s79, %s80
      %p89 = scmp.eq.s32.totalorder %s27, 0
      %p90 = por %p88, %p89
      %p91 = scmp.ne.s32.totalorder %s79, %s80
      %p92 = scmp.eq.s32.totalorder %s28, 1
      %p93 = por %p91, %p92
      %p95 = scmp.ne.s32.totalorder %s80, %s94
      %p96 = scmp.eq.s32.totalorder %s28, 0
      %p97 = por %p95, %p96
      %s99 = sadd.s32 %s98, 1
      %p102 = scmp.eq.s32.totalorder %s22, 1
      %p103 = scmp.ne.s32.totalorder %s98, %s100
      %p104 = scmp.eq.s32.totalorder %s22, 0
      %p105 = por %p103, %p104
      %p106 = scmp.ne.s32.totalorder %s98, %s100
      %p107 = scmp.eq.s32.totalorder %s27, 1
      %p108 = por %p106, %p107
      %p109 = scmp.ne.s32.totalorder %s100, %s101
      %p110 = scmp.eq.s32.totalorder %s27, 0
      %p111 = por %p109, %p110
      %p112 = scmp.ne.s32.totalorder %s100, %s101
      %p113 = scmp.eq.s32.totalorder %s28, 1
      %p114 = por %p112, %p113
      %p116 = scmp.ne.s32.totalorder %s101, %s115
      %p117 = scmp.eq.s32.totalorder %s28, 0
      %p118 = por %p116, %p117
      %s120 = sadd.s32 %s119, 1
      %p123 = scmp.eq.s32.totalorder %s22, 1
      %p124 = scmp.ne.s32.totalorder %s119, %s121
      %p125 = scmp.eq.s32.totalorder %s22, 0
      %p126 = por %p124, %p125
      %p127 = scmp.ne.s32.totalorder %s119, %s121
      %p128 = scmp.eq.s32.totalorder %s27, 1
      %p129 = por %p127, %p128
      %p130 = scmp.ne.s32.totalorder %s121, %s122
      %p131 = scmp.eq.s32.totalorder %s27, 0
      %p132 = por %p130, %p131
      %p133 = scmp.ne.s32.totalorder %s121, %s122
      %p134 = scmp.eq.s32.totalorder %s28, 1
      %p135 = por %p133, %p134
      %p137 = scmp.ne.s32.totalorder %s122, %s136
      %p138 = scmp.eq.s32.totalorder %s28, 0
      %p139 = por %p137, %p138
      %s141 = sadd.s32 %s140, 1
      %p144 = scmp.eq.s32.totalorder %s22, 1
      %p145 = scmp.ne.s32.totalorder %s140, %s142
      %p146 = scmp.eq.s32.totalorder %s22, 0
      %p147 = por %p145, %p146
      %p148 = scmp.ne.s32.totalorder %s140, %s142
      %p149 = scmp.eq.s32.totalorder %s27, 1
      %p150 = por %p148, %p149
      %p151 = scmp.ne.s32.totalorder %s142, %s143
      %p152 = scmp.eq.s32.totalorder %s27, 0
      %p153 = por %p151, %p152
      %p154 = scmp.ne.s32.totalorder %s142, %s143
      %p155 = scmp.eq.s32.totalorder %s28, 1
      %p156 = por %p154, %p155
      %p158 = scmp.ne.s32.totalorder %s143, %s157
      %p159 = scmp.eq.s32.totalorder %s28, 0
      %p160 = por %p158, %p159
      %s162 = sadd.s32 %s161, 1
      %p165 = scmp.eq.s32.totalorder %s22, 1
      %p166 = scmp.ne.s32.totalorder %s161, %s163
      %p167 = scmp.eq.s32.totalorder %s22, 0
      %p168 = por %p166, %p167
      %p169 = scmp.ne.s32.totalorder %s161, %s163
      %p170 = scmp.eq.s32.totalorder %s27, 1
      %p171 = por %p169, %p170
      %p172 = scmp.ne.s32.totalorder %s163, %s164
      %p173 = scmp.eq.s32.totalorder %s27, 0
      %p174 = por %p172, %p173
      %p175 = scmp.ne.s32.totalorder %s163, %s164
      %p176 = scmp.eq.s32.totalorder %s28, 1
      %p177 = por %p175, %p176
      %p179 = scmp.ne.s32.totalorder %s164, %s178
      %p180 = scmp.eq.s32.totalorder %s28, 0
      %p181 = por %p179, %p180
      %s183 = sadd.s32 %s182, 1
      %p186 = scmp.eq.s32.totalorder %s22, 1
      %p187 = scmp.ne.s32.totalorder %s182, %s184
      %p188 = scmp.eq.s32.totalorder %s22, 0
      %p189 = por %p187, %p188
      %p190 = scmp.ne.s32.totalorder %s182, %s184
      %p191 = scmp.eq.s32.totalorder %s27, 1
      %p192 = por %p190, %p191
      %p193 = scmp.ne.s32.totalorder %s184, %s185
      %p194 = scmp.eq.s32.totalorder %s27, 0
      %p195 = por %p193, %p194
      %p196 = scmp.ne.s32.totalorder %s184, %s185
      %p197 = scmp.eq.s32.totalorder %s28, 1
      %p198 = por %p196, %p197
      %p200 = scmp.ne.s32.totalorder %s185, %s199
      %p201 = scmp.eq.s32.totalorder %s28, 0
      %p202 = por %p200, %p201
      %s204 = sadd.s32 %s203, 1
      %p207 = scmp.eq.s32.totalorder %s22, 1
      %p208 = scmp.ne.s32.totalorder %s203, %s205
      %p209 = scmp.eq.s32.totalorder %s22, 0
      %p210 = por %p208, %p209
      %p211 = scmp.ne.s32.totalorder %s203, %s205
      %p212 = scmp.eq.s32.totalorder %s27, 1
      %p213 = por %p211, %p212
      %p214 = scmp.ne.s32.totalorder %s205, %s206
      %p215 = scmp.eq.s32.totalorder %s27, 0
      %p216 = por %p214, %p215
      %p217 = scmp.ne.s32.totalorder %s205, %s206
      %p218 = scmp.eq.s32.totalorder %s28, 1
      %p219 = por %p217, %p218
      %p221 = scmp.ne.s32.totalorder %s206, %s220
      %p222 = scmp.eq.s32.totalorder %s28, 0
      %p223 = por %p221, %p222
      %s225 = sadd.s32 %s224, 1
      %p228 = scmp.eq.s32.totalorder %s22, 1
      %p229 = scmp.ne.s32.totalorder %s224, %s226
      %p230 = scmp.eq.s32.totalorder %s22, 0
      %p231 = por %p229, %p230
      %p232 = scmp.ne.s32.totalorder %s224, %s226
      %p233 = scmp.eq.s32.totalorder %s27, 1
      %p234 = por %p232, %p233
      %p235 = scmp.ne.s32.totalorder %s226, %s227
      %p236 = scmp.eq.s32.totalorder %s27, 0
      %p237 = por %p235, %p236
      %p238 = scmp.ne.s32.totalorder %s226, %s227
      %p239 = scmp.eq.s32.totalorder %s28, 1
      %p240 = por %p238, %p239
      %p242 = scmp.ne.s32.totalorder %s227, %s241
      %p243 = scmp.eq.s32.totalorder %s28, 0
      %p244 = por %p242, %p243
      %s246 = sadd.s32 %s245, 1
      %p249 = scmp.eq.s32.totalorder %s22, 1
      %p250 = scmp.ne.s32.totalorder %s245, %s247
      %p251 = scmp.eq.s32.totalorder %s22, 0
      %p252 = por %p250, %p251
      %p253 = scmp.ne.s32.totalorder %s245, %s247
      %p254 = scmp.eq.s32.totalorder %s27, 1
      %p255 = por %p253, %p254
      %p256 = scmp.ne.s32.totalorder %s247, %s248
      %p257 = scmp.eq.s32.totalorder %s27, 0
      %p258 = por %p256, %p257
      %p259 = scmp.ne.s32.totalorder %s247, %s248
      %p260 = scmp.eq.s32.totalorder %s28, 1
      %p261 = por %p259, %p260
      %p263 = scmp.ne.s32.totalorder %s248, %s262
      %p264 = scmp.eq.s32.totalorder %s28, 0
      %p265 = por %p263, %p264
      %s267 = sadd.s32 %s266, 1
      %p270 = scmp.eq.s32.totalorder %s22, 1
      %p271 = scmp.ne.s32.totalorder %s266, %s268
      %p272 = scmp.eq.s32.totalorder %s22, 0
      %p273 = por %p271, %p272
      %p274 = scmp.ne.s32.totalorder %s266, %s268
      %p275 = scmp.eq.s32.totalorder %s27, 1
      %p276 = por %p274, %p275
      %p277 = scmp.ne.s32.totalorder %s268, %s269
      %p278 = scmp.eq.s32.totalorder %s27, 0
      %p279 = por %p277, %p278
      %p280 = scmp.ne.s32.totalorder %s268, %s269
      %p281 = scmp.eq.s32.totalorder %s28, 1
      %p282 = por %p280, %p281
      %p284 = scmp.ne.s32.totalorder %s269, %s283
      %p285 = scmp.eq.s32.totalorder %s28, 0
      %p286 = por %p284, %p285
      %s288 = sadd.s32 %s287, 1
      %p291 = scmp.eq.s32.totalorder %s22, 1
      %p292 = scmp.ne.s32.totalorder %s287, %s289
      %p293 = scmp.eq.s32.totalorder %s22, 0
      %p294 = por %p292, %p293
      %p295 = scmp.ne.s32.totalorder %s287, %s289
      %p296 = scmp.eq.s32.totalorder %s27, 1
      %p297 = por %p295, %p296
      %p298 = scmp.ne.s32.totalorder %s289, %s290
      %p299 = scmp.eq.s32.totalorder %s27, 0
      %p300 = por %p298, %p299
      %p301 = scmp.ne.s32.totalorder %s289, %s290
      %p302 = scmp.eq.s32.totalorder %s28, 1
      %p303 = por %p301, %p302
      %p305 = scmp.ne.s32.totalorder %s290, %s304
      %p306 = scmp.eq.s32.totalorder %s28, 0
      %p307 = por %p305, %p306
      %s308 = ssub.s32 %s22, %s29
      %p309 = scmp.eq.s32.totalorder %s308, 0
      %s311 = sadd.s32 %s310, 1
      %s312 = scalar_select %p309, %s310, %s311
      %p315 = pneg %p309
      %p316 = scmp.eq.s32.totalorder %s22, 1
      %p317 = por %p315, %p316
      %p318 = scmp.ne.s32.totalorder %s310, %s313
      %p319 = scmp.eq.s32.totalorder %s22, 0
      %p320 = por %p318, %p319
      %p321 = scmp.ne.s32.totalorder %s310, %s313
      %p322 = scmp.eq.s32.totalorder %s27, 1
      %p323 = por %p321, %p322
      %p324 = scmp.ne.s32.totalorder %s313, %s314
      %p325 = scmp.eq.s32.totalorder %s27, 0
      %p326 = por %p324, %p325
      %p327 = scmp.ne.s32.totalorder %s313, %s314
      %p328 = scmp.eq.s32.totalorder %s28, 1
      %p329 = por %p327, %p328
      %p331 = scmp.ne.s32.totalorder %s314, %s330
      %p332 = scmp.eq.s32.totalorder %s28, 0
      %p333 = por %p331, %p332
      %p334 = scmp.le.s32.totalorder 1, %s22
      %p335 = scmp.lt.s32.totalorder %s22, 3
      %p336 = pnand %p334, %p335
      %p337 = pneg %p336
      // Predicated region
      $region9: #{tpu_custom_call.1} parent=5 // pred_check
        _
      $region10: #{tpu_custom_call.1} parent=5 // pred_check_branch
        %339 = sbr.rel (%p336) target = $region12
      $region11: #{tpu_custom_call.1} parent=5 // pred_region
        %s340 = ssub.s32 %s22, 1
        // Predicated region
        $region13: #{tpu_custom_call.1} parent=11 // pred_check
          %p341 = pneg %p69
        $region14: #{tpu_custom_call.1} parent=11 // pred_check_branch
          %343 = sbr.rel (%p341) target = $region16
        $region15: #{tpu_custom_call.1} parent=11 // pred_region
          _
        $region16: #{tpu_custom_call.1} parent=11 // pred_fallthru
          _
        // Predicated region
        $region17: #{tpu_custom_call.1} parent=11 // pred_check
          %p344 = pneg %p90
        $region18: #{tpu_custom_call.1} parent=11 // pred_check_branch
          %346 = sbr.rel (%p344) target = $region20
        $region19: #{tpu_custom_call.1} parent=11 // pred_region
          _
        $region20: #{tpu_custom_call.1} parent=11 // pred_fallthru
          _
        // Predicated region
        $region21: #{tpu_custom_call.1} parent=11 // pred_check
          %p347 = pneg %p111
        $region22: #{tpu_custom_call.1} parent=11 // pred_check_branch
          %349 = sbr.rel (%p347) target = $region24
        $region23: #{tpu_custom_call.1} parent=11 // pred_region
          _
        $region24: #{tpu_custom_call.1} parent=11 // pred_fallthru
          _
        // Predicated region
        $region25: #{tpu_custom_call.1} parent=11 // pred_check
          %p350 = pneg %p132
        $region26: #{tpu_custom_call.1} parent=11 // pred_check_branch
          %352 = sbr.rel (%p350) target = $region28
        $region27: #{tpu_custom_call.1} parent=11 // pred_region
          _
        $region28: #{tpu_custom_call.1} parent=11 // pred_fallthru
          _
        // Predicated region
        $region29: #{tpu_custom_call.1} parent=11 // pred_check
          %p353 = pneg %p153
        $region30: #{tpu_custom_call.1} parent=11 // pred_check_branch
          %355 = sbr.rel (%p353) target = $region32
        $region31: #{tpu_custom_call.1} parent=11 // pred_region
          _
        $region32: #{tpu_custom_call.1} parent=11 // pred_fallthru
          _
        // Predicated region
        $region33: #{tpu_custom_call.1} parent=11 // pred_check
          %p356 = pneg %p174
        $region34: #{tpu_custom_call.1} parent=11 // pred_check_branch
          %358 = sbr.rel (%p356) target = $region36
        $region35: #{tpu_custom_call.1} parent=11 // pred_region
          _
        $region36: #{tpu_custom_call.1} parent=11 // pred_fallthru
          _
        // Predicated region
        $region37: #{tpu_custom_call.1} parent=11 // pred_check
          %p359 = pneg %p195
        $region38: #{tpu_custom_call.1} parent=11 // pred_check_branch
          %361 = sbr.rel (%p359) target = $region40
        $region39: #{tpu_custom_call.1} parent=11 // pred_region
          _
        $region40: #{tpu_custom_call.1} parent=11 // pred_fallthru
          _
        // Predicated region
        $region41: #{tpu_custom_call.1} parent=11 // pred_check
          %p362 = pneg %p216
        $region42: #{tpu_custom_call.1} parent=11 // pred_check_branch
          %364 = sbr.rel (%p362) target = $region44
        $region43: #{tpu_custom_call.1} parent=11 // pred_region
          _
        $region44: #{tpu_custom_call.1} parent=11 // pred_fallthru
          _
        // Predicated region
        $region45: #{tpu_custom_call.1} parent=11 // pred_check
          %p365 = pneg %p237
        $region46: #{tpu_custom_call.1} parent=11 // pred_check_branch
          %367 = sbr.rel (%p365) target = $region48
        $region47: #{tpu_custom_call.1} parent=11 // pred_region
          _
        $region48: #{tpu_custom_call.1} parent=11 // pred_fallthru
          _
        // Predicated region
        $region49: #{tpu_custom_call.1} parent=11 // pred_check
          %p368 = pneg %p258
        $region50: #{tpu_custom_call.1} parent=11 // pred_check_branch
          %370 = sbr.rel (%p368) target = $region52
        $region51: #{tpu_custom_call.1} parent=11 // pred_region
          _
        $region52: #{tpu_custom_call.1} parent=11 // pred_fallthru
          _
        // Predicated region
        $region53: #{tpu_custom_call.1} parent=11 // pred_check
          %p371 = pneg %p279
        $region54: #{tpu_custom_call.1} parent=11 // pred_check_branch
          %373 = sbr.rel (%p371) target = $region56
        $region55: #{tpu_custom_call.1} parent=11 // pred_region
          _
        $region56: #{tpu_custom_call.1} parent=11 // pred_fallthru
          _
        // Predicated region
        $region57: #{tpu_custom_call.1} parent=11 // pred_check
          %p374 = pneg %p300
        $region58: #{tpu_custom_call.1} parent=11 // pred_check_branch
          %376 = sbr.rel (%p374) target = $region60
        $region59: #{tpu_custom_call.1} parent=11 // pred_region
          _
        $region60: #{tpu_custom_call.1} parent=11 // pred_fallthru
          _
      $region12: #{tpu_custom_call.1} parent=5 // pred_fallthru
        _
      %p377 = scmp.lt.s32.totalorder %s22, 2
      // Predicated region
      $region61: #{tpu_custom_call.1} parent=5 // pred_check
        %p378 = pneg %p377
      $region62: #{tpu_custom_call.1} parent=5 // pred_check_branch
        %380 = sbr.rel (%p378) target = $region64
      $region63: #{tpu_custom_call.1} parent=5 // pred_region
        // Predicated region
        $region65: #{tpu_custom_call.1} parent=63 // pred_check
          %p381 = pneg %p42
        $region66: #{tpu_custom_call.1} parent=63 // pred_check_branch
          %383 = sbr.rel (%p381) target = $region68
        $region67: #{tpu_custom_call.1} parent=63 // pred_region
          %s384 = smul.u32 2, %s22
          %p385 = scmp.lt.s32.totalorder %s384, 3
          %s386 = scalar_select %p385, %s384, 3
          %s387 = smul.addr %s386, 8
          %s388 = scalar_lea.vmem %s0, %s387
          %s389 = smul.u32 2, %s22
        $region68: #{tpu_custom_call.1} parent=63 // pred_fallthru
          _
      $region64: #{tpu_custom_call.1} parent=5 // pred_fallthru
        _
      %p390 = scmp.le.s32.totalorder 1, %s22
      %p391 = scmp.lt.s32.totalorder %s22, 3
      %p392 = pnand %p390, %p391
      %p393 = pneg %p392
      // Predicated region
      $region69: #{tpu_custom_call.1} parent=5 // pred_check
        _
      $region70: #{tpu_custom_call.1} parent=5 // pred_check_branch
        %395 = sbr.rel (%p392) target = $region72
      $region71: #{tpu_custom_call.1} parent=5 // pred_region
        %s396 = ssub.s32 %s22, 1
        %s397 = smul.u32 2, %s27
        %p398 = scmp.lt.s32.totalorder %s397, 3
        %s399 = scalar_select %p398, %s397, 3
        %s400 = smul.addr %s399, 8
        %s401 = scalar_lea.vmem %s0, %s400
        %p402 = pneg %p48
        %p403 = pneg %p45
        %p404 = pneg %p69
        %p405 = pneg %p66
        %p406 = pneg %p90
        %p407 = pneg %p87
        %p408 = pneg %p111
        %p409 = pneg %p108
        %p410 = pneg %p132
        %p411 = pneg %p129
        %p412 = pneg %p153
        %p413 = pneg %p150
        %p414 = pneg %p174
        %p415 = pneg %p171
        %p416 = pneg %p195
        %p417 = pneg %p192
        %p418 = pneg %p216
        %p419 = pneg %p213
        %p420 = pneg %p237
        %p421 = pneg %p234
        %p422 = pneg %p258
        %p423 = pneg %p255
        %p424 = pneg %p279
        %p425 = pneg %p276
        %p426 = pneg %p300
        %p427 = pneg %p297
        %p428 = pneg %p326
        %p429 = pneg %p323
        %s430 = sand.u32 %s313, 1
        %s431 = scalar_lea.sflag [#allocation4], %s430
        %s432 = sand.u32 %s313, 1
        %s433 = smul.addr %s432, 16
        %s434 = scalar_lea.vmem [#allocation3], %s433
        %s435 = smul.u32 2, %s27
        %p436 = scmp.lt.s32.totalorder %s435, 3
        %s437 = scalar_select %p436, %s435, 3
        %s438 = smul.addr %s437, 8
        %s439 = scalar_lea.vmem %s0, %s438
        %s440 = smul.u32 2, %s27
        %s441 = smul.u32 2, %s27
        %v443 = vld [vmem:[%s1] sm:$0x1]
        %v444 = vld [vmem:[%s2] sm:$0x1]
        %v445 = vld [vmem:[%s3] sm:$0xf]
        %v446 = vld [vmem:[%s3 + $0x4] sm:$0xf]
        %v447 = vld [vmem:[%s4] sm:$0xff]
        %v448 = vld [vmem:[%s4 + $0x8] sm:$0xff]
        %v449 = vld [vmem:[%s5] sm:$0xf]
        %v450 = vld [vmem:[%s6] sm:$0xff]
        %v451 = vld [vmem:[%s439] sm:$0xff]
        %vm452 = vcmask 261120
        %v453 = vsel %vm452, %v451, 0.0
        %454 = vadd.xlane.f32.xlu0 %v453
        %v455 = vpop.xlane.xlu0 %454
        %v456 = vrcp.pop 32.0
        %v457 = vmul.f32 %v455, %v456
        %v458 = vsub.f32 %v451, %v457
        %v459 = vmul.f32 %v458, %v458
        %v460 = vsel %vm452, %v459, 0.0
        %461 = vadd.xlane.f32.xlu0 %v460
        %v462 = vpop.xlane.xlu0 %461
        %v463 = vmul.f32 %v462, %v456
        %v464 = vadd.f32 %v463, 1e-05
        %v465 = vrsqrt.pop %v464
        %v466 = vmul.f32 %v458, %v465
        %v468 = vlaneseq
        %v469 = vshrl.u32 %v468, 7
        %v470 = vsub.s32 0, %v469
        %v471 = vrot.slane %v443, %v470
        %v473 = vmul.f32 %v466, %v471
        %v475 = vlaneseq
        %v476 = vshrl.u32 %v475, 7
        %v477 = vsub.s32 0, %v476
        %v478 = vrot.slane %v444, %v477
        %v480 = vadd.f32 %v473, %v478
        %v481 = vpack.c.bf16 %v480, %v480
        %483 = vset.pattern.permute.xlu0 0
        %484 = vperm.xlu0 %483, %v447
        %v485 = vpop.permute.xlu0 %484
        %488 = vset.pattern.permute.xlu0 0
        %489 = vperm.xlu0 %488, %v448
        %v490 = vpop.permute.xlu0 %489
        %v494 = vunpack.c.l.b16 %v445
        %v495 = vunpack.c.l.b16 %v446
        %v496 = vpack.c.b16 %v495, %v494
        %vm497 = vcmask 64512
        %v499 = vsel %vm497, %v496, 0
        %vm501 = vcmask 1043456
        %v503 = vsel %vm501, %v481, 0
        %505 = vmatprep.subr.bf16.mxu0 0
        %506 = vmatpush1.bf16.msra.mxu0 %v503
        %507 = vmatprep.subr.bf16.mxu0 0
        %508 = vmatpush1.bf16.msra.mxu0 0
        %509 = vmatprep.subr.bf16.mxu0 0
        %510 = vmatpush1.bf16.msra.mxu0 0
        %511 = vmatprep.subr.bf16.mxu0 0
        %512 = vmatpush1.bf16.msra.mxu0 0
        %513 = vmatprep.subr.bf16.mxu0 0
        %514 = vmatpush1.bf16.msra.mxu0 0
        %515 = vmatprep.subr.bf16.mxu0 0
        %516 = vmatpush1.bf16.msra.mxu0 0
        %517 = vmatprep.subr.bf16.mxu0 0
        %518 = vmatpush1.bf16.msra.mxu0 0
        %519 = vmatprep.subr.bf16.mxu0 0
        %520 = vmatpush1.bf16.msra.mxu0 0
        %521 = vmatprep.subr.bf16.mxu0 0
        %522 = vmatpush1.bf16.msra.mxu0 0
        %523 = vmatprep.subr.bf16.mxu0 0
        %524 = vmatpush1.bf16.msra.mxu0 0
        %525 = vmatprep.subr.bf16.mxu0 0
        %526 = vmatpush1.bf16.msra.mxu0 0
        %527 = vmatprep.subr.bf16.mxu0 0
        %528 = vmatpush1.bf16.msra.mxu0 0
        %529 = vmatprep.subr.bf16.mxu0 0
        %530 = vmatpush1.bf16.msra.mxu0 0
        %531 = vmatprep.subr.bf16.mxu0 0
        %532 = vmatpush1.bf16.msra.mxu0 0
        %533 = vmatprep.subr.bf16.mxu0 0
        %534 = vmatpush1.bf16.msra.mxu0 0
        %535 = vmatprep.subr.bf16.mxu0 0
        %536 = vmatpush1.bf16.msra.mxu0 0
        %537 = vmatprep.mubr.bf16.mxu0 0
        %538 = vmatmul.mubr.bf16.gmra.mrb[0].mxu0 %v499
        %v539 = vpop.f32.mrb[0].mxu0
        %v540 = vadd.f32 %v485, %v539
        %v541 = vpop.f32.mrb[0].mxu0
        %v542 = vpop.f32.mrb[0].mxu0
        %v543 = vadd.f32 %v490, %v542
        %v544 = vpop.f32.mrb[0].mxu0
        %545 = vdwg.mxu0
        %v546 = vmul.f32 %v540, 0.5
        %v547 = vmul.f32 %v543, 0.5
        %v548 = vmul.f32 %v540, 0.70710677
        %v549 = vmul.f32 %v543, 0.70710677
        %v550 = verf.f32.pop %v548
        %v551 = verf.f32.pop %v549
        %v552 = vadd.f32 %v550, 1.0
        %v553 = vadd.f32 %v551, 1.0
        %v554 = vmul.f32 %v546, %v552
        %v555 = vmul.f32 %v547, %v553
        %v556 = vpack.c.bf16 %v555, %v554
        %vm557 = vcmask 130048
        %v559 = vsel %vm557, %v449, 0
        %561 = vmatprep.subr.bf16.mxu0 0
        %562 = vmatpush1.bf16.msra.mxu0 %v556
        %563 = vmatprep.subr.bf16.mxu0 0
        %564 = vmatpush1.bf16.msra.mxu0 0
        %565 = vmatprep.subr.bf16.mxu0 0
        %566 = vmatpush1.bf16.msra.mxu0 0
        %567 = vmatprep.subr.bf16.mxu0 0
        %568 = vmatpush1.bf16.msra.mxu0 0
        %569 = vmatprep.subr.bf16.mxu0 0
        %570 = vmatpush1.bf16.msra.mxu0 0
        %571 = vmatprep.subr.bf16.mxu0 0
        %572 = vmatpush1.bf16.msra.mxu0 0
        %573 = vmatprep.subr.bf16.mxu0 0
        %574 = vmatpush1.bf16.msra.mxu0 0
        %575 = vmatprep.subr.bf16.mxu0 0
        %576 = vmatpush1.bf16.msra.mxu0 0
        %577 = vmatprep.subr.bf16.mxu0 0
        %578 = vmatpush1.bf16.msra.mxu0 0
        %579 = vmatprep.subr.bf16.mxu0 0
        %580 = vmatpush1.bf16.msra.mxu0 0
        %581 = vmatprep.subr.bf16.mxu0 0
        %582 = vmatpush1.bf16.msra.mxu0 0
        %583 = vmatprep.subr.bf16.mxu0 0
        %584 = vmatpush1.bf16.msra.mxu0 0
        %585 = vmatprep.subr.bf16.mxu0 0
        %586 = vmatpush1.bf16.msra.mxu0 0
        %587 = vmatprep.subr.bf16.mxu0 0
        %588 = vmatpush1.bf16.msra.mxu0 0
        %589 = vmatprep.subr.bf16.mxu0 0
        %590 = vmatpush1.bf16.msra.mxu0 0
        %591 = vmatprep.subr.bf16.mxu0 0
        %592 = vmatpush1.bf16.msra.mxu0 0
        %593 = vmatprep.mubr.bf16.mxu0 0
        %594 = vmatmul.mubr.bf16.gmra.mrb[0].mxu0 %v559
        %v595 = vpop.f32.mrb[0].mxu0
        %v596 = vadd.f32 0.0, %v595
        %v597 = vpop.f32.mrb[0].mxu0
        %v598 = vpop.f32.mrb[0].mxu0
        %v599 = vpop.f32.mrb[0].mxu0
        %600 = vdwg.mxu0
        %v601 = vadd.f32 %v451, %v596
        %603 = vset.pattern.permute.xlu0 0
        %604 = vperm.xlu0 %603, %v450
        %v605 = vpop.permute.xlu0 %604
        %v607 = vadd.f32 %v601, %v605
        %608 = vst.msk [vmem:[#allocation2] sm:$0xff] %vm452, %v607
        %s609 = scalar_lea.vmem %s439, 8
        %v610 = vld [vmem:[%s609] sm:$0xff]
        %v611 = vsel %vm452, %v610, 0.0
        %612 = vadd.xlane.f32.xlu0 %v611
        %v613 = vpop.xlane.xlu0 %612
        %v614 = vmul.f32 %v613, %v456
        %v615 = vsub.f32 %v610, %v614
        %v616 = vmul.f32 %v615, %v615
        %v617 = vsel %vm452, %v616, 0.0
        %618 = vadd.xlane.f32.xlu0 %v617
        %v619 = vpop.xlane.xlu0 %618
        %v620 = vmul.f32 %v619, %v456
        %v621 = vadd.f32 %v620, 1e-05
        %v622 = vrsqrt.pop %v621
        %v623 = vmul.f32 %v615, %v622
        %v624 = vmul.f32 %v623, %v471
        %v625 = vadd.f32 %v624, %v478
        %v626 = vpack.c.bf16 %v625, %v625
        %v628 = vsel %vm501, %v626, 0
        %630 = vmatprep.subr.bf16.mxu0 0
        %631 = vmatpush1.bf16.msra.mxu0 %v628
        %632 = vmatprep.subr.bf16.mxu0 0
        %633 = vmatpush1.bf16.msra.mxu0 0
        %634 = vmatprep.subr.bf16.mxu0 0
        %635 = vmatpush1.bf16.msra.mxu0 0
        %636 = vmatprep.subr.bf16.mxu0 0
        %637 = vmatpush1.bf16.msra.mxu0 0
        %638 = vmatprep.subr.bf16.mxu0 0
        %639 = vmatpush1.bf16.msra.mxu0 0
        %640 = vmatprep.subr.bf16.mxu0 0
        %641 = vmatpush1.bf16.msra.mxu0 0
        %642 = vmatprep.subr.bf16.mxu0 0
        %643 = vmatpush1.bf16.msra.mxu0 0
        %644 = vmatprep.subr.bf16.mxu0 0
        %645 = vmatpush1.bf16.msra.mxu0 0
        %646 = vmatprep.subr.bf16.mxu0 0
        %647 = vmatpush1.bf16.msra.mxu0 0
        %648 = vmatprep.subr.bf16.mxu0 0
        %649 = vmatpush1.bf16.msra.mxu0 0
        %650 = vmatprep.subr.bf16.mxu0 0
        %651 = vmatpush1.bf16.msra.mxu0 0
        %652 = vmatprep.subr.bf16.mxu0 0
        %653 = vmatpush1.bf16.msra.mxu0 0
        %654 = vmatprep.subr.bf16.mxu0 0
        %655 = vmatpush1.bf16.msra.mxu0 0
        %656 = vmatprep.subr.bf16.mxu0 0
        %657 = vmatpush1.bf16.msra.mxu0 0
        %658 = vmatprep.subr.bf16.mxu0 0
        %659 = vmatpush1.bf16.msra.mxu0 0
        %660 = vmatprep.subr.bf16.mxu0 0
        %661 = vmatpush1.bf16.msra.mxu0 0
        %662 = vmatprep.mubr.bf16.mxu0 0
        %663 = vmatmul.mubr.bf16.gmra.mrb[0].mxu0 %v499
        %v664 = vpop.f32.mrb[0].mxu0
        %v665 = vadd.f32 %v485, %v664
        %v666 = vpop.f32.mrb[0].mxu0
        %v667 = vpop.f32.mrb[0].mxu0
        %v668 = vadd.f32 %v490, %v667
        %v669 = vpop.f32.mrb[0].mxu0
        %670 = vdwg.mxu0
        %v671 = vmul.f32 %v665, 0.5
        %v672 = vmul.f32 %v668, 0.5
        %v673 = vmul.f32 %v665, 0.70710677
        %v674 = vmul.f32 %v668, 0.70710677
        %v675 = verf.f32.pop %v673
        %v676 = verf.f32.pop %v674
        %v677 = vadd.f32 %v675, 1.0
        %v678 = vadd.f32 %v676, 1.0
        %v679 = vmul.f32 %v671, %v677
        %v680 = vmul.f32 %v672, %v678
        %v681 = vpack.c.bf16 %v680, %v679
        %682 = vmatprep.subr.bf16.mxu0 0
        %683 = vmatpush1.bf16.msra.mxu0 %v681
        %684 = vmatprep.subr.bf16.mxu0 0
        %685 = vmatpush1.bf16.msra.mxu0 0
        %686 = vmatprep.subr.bf16.mxu0 0
        %687 = vmatpush1.bf16.msra.mxu0 0
        %688 = vmatprep.subr.bf16.mxu0 0
        %689 = vmatpush1.bf16.msra.mxu0 0
        %690 = vmatprep.subr.bf16.mxu0 0
        %691 = vmatpush1.bf16.msra.mxu0 0
        %692 = vmatprep.subr.bf16.mxu0 0
        %693 = vmatpush1.bf16.msra.mxu0 0
        %694 = vmatprep.subr.bf16.mxu0 0
        %695 = vmatpush1.bf16.msra.mxu0 0
        %696 = vmatprep.subr.bf16.mxu0 0
        %697 = vmatpush1.bf16.msra.mxu0 0
        %698 = vmatprep.subr.bf16.mxu0 0
        %699 = vmatpush1.bf16.msra.mxu0 0
        %700 = vmatprep.subr.bf16.mxu0 0
        %701 = vmatpush1.bf16.msra.mxu0 0
        %702 = vmatprep.subr.bf16.mxu0 0
        %703 = vmatpush1.bf16.msra.mxu0 0
        %704 = vmatprep.subr.bf16.mxu0 0
        %705 = vmatpush1.bf16.msra.mxu0 0
        %706 = vmatprep.subr.bf16.mxu0 0
        %707 = vmatpush1.bf16.msra.mxu0 0
        %708 = vmatprep.subr.bf16.mxu0 0
        %709 = vmatpush1.bf16.msra.mxu0 0
        %710 = vmatprep.subr.bf16.mxu0 0
        %711 = vmatpush1.bf16.msra.mxu0 0
        %712 = vmatprep.subr.bf16.mxu0 0
        %713 = vmatpush1.bf16.msra.mxu0 0
        %714 = vmatprep.mubr.bf16.mxu0 0
        %715 = vmatmul.mubr.bf16.gmra.mrb[0].mxu0 %v559
        %v716 = vpop.f32.mrb[0].mxu0
        %v717 = vadd.f32 0.0, %v716
        %v718 = vpop.f32.mrb[0].mxu0
        %v719 = vpop.f32.mrb[0].mxu0
        %v720 = vpop.f32.mrb[0].mxu0
        %721 = vdwg.mxu0
        %v722 = vadd.f32 %v610, %v717
        %v723 = vadd.f32 %v722, %v605
        %s724 = scalar_lea.vmem [#allocation2], 8
        %725 = vst.msk [vmem:[%s724] sm:$0xff] %vm452, %v723
        %v726 = vld [vmem:[#allocation2] sm:$0xff]
        %v727 = vld [vmem:[#allocation2 + $0x8] sm:$0xff]
        %v728 = vld [vmem:[%s7] sm:$0x1]
        %v729 = vld [vmem:[%s8] sm:$0x1]
        %v730 = vsel %vm452, %v726, 0.0
        %731 = vadd.xlane.f32.xlu0 %v730
        %v732 = vpop.xlane.xlu0 %731
        %v733 = vsel %vm452, %v727, 0.0
        %734 = vadd.xlane.f32.xlu0 %v733
        %v735 = vpop.xlane.xlu0 %734
        %v736 = vmul.f32 %v732, %v456
        %v737 = vmul.f32 %v735, %v456
        %v738 = vsub.f32 %v726, %v736
        %v739 = vsub.f32 %v727, %v737
        %v740 = vmul.f32 %v738, %v738
        %v741 = vmul.f32 %v739, %v739
        %v742 = vsel %vm452, %v740, 0.0
        %743 = vadd.xlane.f32.xlu0 %v742
        %v744 = vpop.xlane.xlu0 %743
        %v745 = vsel %vm452, %v741, 0.0
        %746 = vadd.xlane.f32.xlu0 %v745
        %v747 = vpop.xlane.xlu0 %746
        %v748 = vmul.f32 %v744, %v456
        %v749 = vmul.f32 %v747, %v456
        %v750 = vadd.f32 %v748, 1e-05
        %v751 = vadd.f32 %v749, 1e-05
        %v752 = vrsqrt.pop %v750
        %v753 = vrsqrt.pop %v751
        %v754 = vmul.f32 %v738, %v752
        %v755 = vmul.f32 %v739, %v753
        %v757 = vlaneseq
        %v758 = vshrl.u32 %v757, 7
        %v759 = vsub.s32 0, %v758
        %v760 = vrot.slane %v728, %v759
        %v762 = vmul.f32 %v754, %v760
        %v763 = vmul.f32 %v755, %v760
        %v765 = vlaneseq
        %v766 = vshrl.u32 %v765, 7
        %v767 = vsub.s32 0, %v766
        %v768 = vrot.slane %v729, %v767
        %v770 = vadd.f32 %v762, %v768
        %v771 = vadd.f32 %v763, %v768
        %v772 = vpack.c.bf16 %v771, %v770
        %v773 = vld [vmem:[%s9] sm:$0xf]
        %v774 = vld [vmem:[%s9 + $0x4] sm:$0xf]
        %v775 = vld [vmem:[%s9 + $0x8] sm:$0xf]
        %v776 = vld [vmem:[%s9 + $0xc] sm:$0xf]
        %v777 = vld [vmem:[%s10] sm:$0x1]
        %v779 = vlaneseq
        %v780 = vshrl.u32 %v779, 7
        %v781 = vsub.s32 0, %v780
        %v782 = vrot.slane %v777, %v781
        %v788 = vunpack.c.l.b16 %v773
        %v789 = vunpack.c.l.b16 %v774
        %v790 = vunpack.c.l.b16 %v775
        %v791 = vunpack.c.l.b16 %v776
        %v792 = vpack.c.b16 %v789, %v788
        %v793 = vpack.c.b16 %v791, %v790
        %v797 = vsel %vm452, %v772, 0
        %799 = vmatprep.subr.bf16.mxu0 0
        %800 = vmatpush1.bf16.msra.mxu0 %v792
        %801 = vmatprep.subr.bf16.mxu0 0
        %802 = vmatpush1.bf16.msra.mxu0 %v793
        %803 = vmatprep.subr.bf16.mxu0 0
        %804 = vmatpush1.bf16.msra.mxu0 0
        %805 = vmatprep.subr.bf16.mxu0 0
        %806 = vmatpush1.bf16.msra.mxu0 0
        %807 = vmatprep.subr.bf16.mxu0 0
        %808 = vmatpush1.bf16.msra.mxu0 0
        %809 = vmatprep.subr.bf16.mxu0 0
        %810 = vmatpush1.bf16.msra.mxu0 0
        %811 = vmatprep.subr.bf16.mxu0 0
        %812 = vmatpush1.bf16.msra.mxu0 0
        %813 = vmatprep.subr.bf16.mxu0 0
        %814 = vmatpush1.bf16.msra.mxu0 0
        %815 = vmatprep.subr.bf16.mxu0 0
        %816 = vmatpush1.bf16.msra.mxu0 0
        %817 = vmatprep.subr.bf16.mxu0 0
        %818 = vmatpush1.bf16.msra.mxu0 0
        %819 = vmatprep.subr.bf16.mxu0 0
        %820 = vmatpush1.bf16.msra.mxu0 0
        %821 = vmatprep.subr.bf16.mxu0 0
        %822 = vmatpush1.bf16.msra.mxu0 0
        %823 = vmatprep.subr.bf16.mxu0 0
        %824 = vmatpush1.bf16.msra.mxu0 0
        %825 = vmatprep.subr.bf16.mxu0 0
        %826 = vmatpush1.bf16.msra.mxu0 0
        %827 = vmatprep.subr.bf16.mxu0 0
        %828 = vmatpush1.bf16.msra.mxu0 0
        %829 = vmatprep.subr.bf16.mxu0 0
        %830 = vmatpush1.bf16.msra.mxu0 0
        %831 = vmatprep.mubr.bf16.mxu0 0
        %832 = vmatmul.mubr.bf16.gmra.mrb[0].mxu0 %v797
        %v833 = vpop.f32.mrb[0].mxu0
        %v834 = vadd.f32 %v782, %v833
        %v835 = vpop.f32.mrb[0].mxu0
        %v836 = vpop.f32.mrb[0].mxu0
        %v837 = vadd.f32 %v782, %v836
        %v838 = vpop.f32.mrb[0].mxu0
        %839 = vdwg.mxu0
        %v840 = vmul.f32 %v834, 0.5
        %v841 = vmul.f32 %v837, 0.5
        %v842 = vmul.f32 %v834, 0.70710677
        %v843 = vmul.f32 %v837, 0.70710677
        %v844 = verf.f32.pop %v842
        %v845 = verf.f32.pop %v843
        %v846 = vadd.f32 %v844, 1.0
        %v847 = vadd.f32 %v845, 1.0
        %v848 = vmul.f32 %v840, %v846
        %v849 = vmul.f32 %v841, %v847
        %v850 = vpack.c.bf16 %v849, %v848
        %v851 = vld [vmem:[%s11] sm:$0xf]
        %v852 = vld [vmem:[%s11 + $0x4] sm:$0xf]
        %v853 = vld [vmem:[%s11 + $0x8] sm:$0xf]
        %v854 = vld [vmem:[%s11 + $0xc] sm:$0xf]
        %v855 = vld [vmem:[%s11 + $0x10] sm:$0xf]
        %v856 = vld [vmem:[%s11 + $0x14] sm:$0xf]
        %v857 = vld [vmem:[%s11 + $0x18] sm:$0xf]
        %v858 = vld [vmem:[%s11 + $0x1c] sm:$0xf]
        %v859 = vld [vmem:[%s12] sm:$0x1]
        %v861 = vlaneseq
        %v862 = vshrl.u32 %v861, 7
        %v863 = vsub.s32 0, %v862
        %v864 = vrot.slane %v859, %v863
        %v874 = vunpack.c.l.b16 %v851
        %v875 = vunpack.c.l.b16 %v852
        %v876 = vunpack.c.l.b16 %v853
        %v877 = vunpack.c.l.b16 %v854
        %v878 = vunpack.c.l.b16 %v855
        %v879 = vunpack.c.l.b16 %v856
        %v880 = vunpack.c.l.b16 %v857
        %v881 = vunpack.c.l.b16 %v858
        %v882 = vpack.c.b16 %v875, %v874
        %v883 = vpack.c.b16 %v877, %v876
        %v884 = vpack.c.b16 %v879, %v878
        %v885 = vpack.c.b16 %v881, %v880
        %vm890 = vcmask 523264
        %v892 = vsel %vm890, %v850, 0
        %894 = vmatprep.subr.bf16.mxu0 0
        %895 = vmatpush1.bf16.msra.mxu0 %v882
        %896 = vmatprep.subr.bf16.mxu0 0
        %897 = vmatpush1.bf16.msra.mxu0 %v883
        %898 = vmatprep.subr.bf16.mxu0 0
        %899 = vmatpush1.bf16.msra.mxu0 %v884
        %900 = vmatprep.subr.bf16.mxu0 0
        %901 = vmatpush1.bf16.msra.mxu0 %v885
        %902 = vmatprep.subr.bf16.mxu0 0
        %903 = vmatpush1.bf16.msra.mxu0 0
        %904 = vmatprep.subr.bf16.mxu0 0
        %905 = vmatpush1.bf16.msra.mxu0 0
        %906 = vmatprep.subr.bf16.mxu0 0
        %907 = vmatpush1.bf16.msra.mxu0 0
        %908 = vmatprep.subr.bf16.mxu0 0
        %909 = vmatpush1.bf16.msra.mxu0 0
        %910 = vmatprep.subr.bf16.mxu0 0
        %911 = vmatpush1.bf16.msra.mxu0 0
        %912 = vmatprep.subr.bf16.mxu0 0
        %913 = vmatpush1.bf16.msra.mxu0 0
        %914 = vmatprep.subr.bf16.mxu0 0
        %915 = vmatpush1.bf16.msra.mxu0 0
        %916 = vmatprep.subr.bf16.mxu0 0
        %917 = vmatpush1.bf16.msra.mxu0 0
        %918 = vmatprep.subr.bf16.mxu0 0
        %919 = vmatpush1.bf16.msra.mxu0 0
        %920 = vmatprep.subr.bf16.mxu0 0
        %921 = vmatpush1.bf16.msra.mxu0 0
        %922 = vmatprep.subr.bf16.mxu0 0
        %923 = vmatpush1.bf16.msra.mxu0 0
        %924 = vmatprep.subr.bf16.mxu0 0
        %925 = vmatpush1.bf16.msra.mxu0 0
        %926 = vmatprep.mubr.bf16.mxu0 0
        %927 = vmatmul.mubr.bf16.gmra.mrb[0].mxu0 %v892
        %v928 = vpop.f32.mrb[0].mxu0
        %v929 = vadd.f32 %v864, %v928
        %v930 = vpop.f32.mrb[0].mxu0
        %v931 = vpop.f32.mrb[0].mxu0
        %v932 = vadd.f32 %v864, %v931
        %v933 = vpop.f32.mrb[0].mxu0
        %934 = vdwg.mxu0
        %v935 = vadd.f32 %v726, %v929
        %v936 = vadd.f32 %v727, %v932
        %937 = vst.msk [vmem:[%s434] sm:$0xff] %vm452, %v935
        %938 = vst.msk [vmem:[%s434 + $0x8] sm:$0xff] %vm452, %v936
        %s939 = sand.u32 %s313, 1
        %s940 = scalar_lea.sflag [#allocation4], %s939
        %s941 = sand.u32 %s313, 1
        %s942 = smul.addr %s941, 16
        %s943 = scalar_lea.vmem [#allocation3], %s942
        // Predicated region
        $region73: #{tpu_custom_call.1} parent=71 // pred_check
          %p944 = pneg %p323
        $region74: #{tpu_custom_call.1} parent=71 // pred_check_branch
          %946 = sbr.rel (%p944) target = $region76
        $region75: #{tpu_custom_call.1} parent=71 // pred_region
          %s947 = smul.u32 2, %s27
          %s949 = ssub.s32 256, 256
          %950 = vsyncadd %s940, %s949
          %s951 = smul.addr %s947, 128
          %s952 = scalar_lea.hbm %s13, %s951
          %s953 = sshll.u32 %s943, 4
          %s954 = int_to_ptr.vmem [resolvable:$true] %s953
          %959 = dma.vmem_to_hbm [thread:$0]  %s954, 256, %s952, %s940, 128, 128, 8
        $region76: #{tpu_custom_call.1} parent=71 // pred_fallthru
          _
      $region72: #{tpu_custom_call.1} parent=5 // pred_fallthru
        _
      %p960 = scmp.le.s32.totalorder 2, %s22
      // Predicated region
      $region77: #{tpu_custom_call.1} parent=5 // pred_check
        %p961 = pneg %p960
      $region78: #{tpu_custom_call.1} parent=5 // pred_check_branch
        %963 = sbr.rel (%p961) target = $region80
      $region79: #{tpu_custom_call.1} parent=5 // pred_region
        %s964 = ssub.s32 %s22, 2
        // Predicated region
        $region81: #{tpu_custom_call.1} parent=79 // pred_check
          %p965 = pneg %p329
        $region82: #{tpu_custom_call.1} parent=79 // pred_check_branch
          %967 = sbr.rel (%p965) target = $region84
        $region83: #{tpu_custom_call.1} parent=79 // pred_region
          %s968 = sand.u32 %s314, 1
          %s969 = scalar_lea.sflag [#allocation4], %s968
          %s970 = sand.u32 %s314, 1
          %s971 = smul.addr %s970, 16
          %s972 = scalar_lea.vmem [#allocation3], %s971
          %973 = dma.done %s969, 256
        $region84: #{tpu_custom_call.1} parent=79 // pred_fallthru
          _
      $region80: #{tpu_custom_call.1} parent=5 // pred_fallthru
        _
    $region6: #{tpu_custom_call.1} parent=1 // loop_footer
      %s26 = sadd.s32 1, %s22
    $region7: #{tpu_custom_call.1} parent=1 // loop_footer_branch
      %21 = sbr.rel target = $region3
    $region8: #{tpu_custom_call.1} parent=1 // loop_exit
      _
    %974 = vsyncpa [#allocation4], 1
    %s975 = scalar_lea.sflag [#allocation4], 1
    %976 = vsyncpa %s975, 1

</llo_original>
